<compile_context>
chip_gen: v7x
topology: tpu7x:2x2x1
jax: 0.10.0
libtpu: 0.0.40
codegen_flags: <defaults>
</compile_context>

<pallas_src>
import functools
import math

import numpy as np
import jax
import jax.numpy as jnp
from jax import lax
from jax.experimental import pallas as pl
from jax.experimental.pallas import tpu as pltpu


# ---------------------------------------------------------------------------
# tiling / budget helpers
# ---------------------------------------------------------------------------
def _vmem_budgets():
    """(per-kernel row-tile working-set cap, compiler vmem limit) in bytes."""
    try:
        kind = jax.devices()[0].device_kind.lower()
    except Exception:  # pragma: no cover
        kind = ""
    if any(tag in kind for tag in ("v4", "v5", "v6")):
        return 24 << 20, 64 << 20            # 128 MiB VMEM parts: big tiles
    if "7" in kind:
        return 10 << 20, 44 << 20            # v7x: 64 MiB physical VMEM
    return 8 << 20, 32 << 20                 # unknown: conservative


def _channel_blocking(c_out, v):
    """Channels per packed block so each block spans a multiple of 128 lanes
    (and at most ~512 lanes)."""
    unit = 128 // math.gcd(v, 128)           # min channels for lane alignment
    padded = ((c_out + unit - 1) // unit) * unit
    c_blk = unit
    while c_blk * 2 * v <= 512 and c_blk * 2 <= padded:
        c_blk *= 2
    n_cb = -(-c_out // c_blk)                # ceil
    return c_blk, n_cb


def _pick_row_tile(nt, per_row_bytes, fixed_bytes, cap_bytes, min_tiles=2):
    """Largest row tile (multiple of 8 dividing NT, or NT itself) whose
    working set (incl. resident fixed blocks) stays under cap; prefer >= 2
    tiles so the parallel row axis can shard over 2 TensorCores."""
    cands = [d for d in range(8, nt + 1, 8) if nt % d == 0] or [nt]
    budget = cap_bytes - fixed_bytes
    fit = [d for d in cands if d * per_row_bytes <= budget] or [min(cands)]
    multi = [d for d in fit if (nt // d) >= min_tiles]
    return max(multi) if multi else max(fit)


def _finalize_stats(s1, s2, piv, rows, axes):
    """Chan-combine pivot-shifted per-partition sums into pooled mean and
    (biased) variance.  s1 = sum(x - piv), s2 = sum((x - piv)^2) over `rows`
    rows per partition; partition axes are `axes`, the rest are channels."""
    rows = float(rows)
    mean_p = piv + s1 / rows
    m2_p = s2 - (s1 * s1) / rows
    nparts = 1
    for a in axes:
        nparts *= s1.shape[a]
    mean = jnp.mean(mean_p, axis=axes, keepdims=True)
    d = mean_p - mean
    m2 = jnp.sum(m2_p + rows * d * d, axis=axes, keepdims=True)
    var = m2 / (rows * nparts)
    return jnp.squeeze(mean, axis=axes), jnp.squeeze(var, axis=axes)


# ---------------------------------------------------------------------------
# Kernel 1: fused pointwise projection + 1x1 down conv + per-tile batch stats
# ---------------------------------------------------------------------------
def _linear_kernel(x_ref, w_ref, b_ref, y_ref, st_ref):
    y = jnp.dot(x_ref[...], w_ref[...], preferred_element_type=jnp.float32)
    y = y + b_ref[...]
    y_ref[...] = y.astype(y_ref.dtype)
    piv = y[0:1, :]                           # per-tile pivot (numerics)
    d = y - piv
    st_ref[0] = jnp.concatenate(
        [jnp.sum(d, axis=0, keepdims=True),
         jnp.sum(d * d, axis=0, keepdims=True),
         piv], axis=0)


def linear_with_stats(xp, w_exp, b_exp, *, cap_bytes, vmem_limit):
    nt, lane_in = xp.shape
    ltot = w_exp.shape[1]
    per_row = 2 * 2 * (lane_in + ltot)               # bf16 in/out, double-buffered
    fixed = 2 * 2 * lane_in * ltot + 16 * ltot       # resident weight (x2) + bias/stats
    tr = _pick_row_tile(nt, per_row, fixed, cap_bytes)
    n_tiles = nt // tr
    y1, st = pl.pallas_call(
        _linear_kernel,
        out_shape=(jax.ShapeDtypeStruct((nt, ltot), jnp.bfloat16),
                   jax.ShapeDtypeStruct((n_tiles, 3, ltot), jnp.float32)),
        grid=(n_tiles,),
        in_specs=[
            pl.BlockSpec((tr, lane_in), lambda i: (i, 0)),
            pl.BlockSpec((lane_in, ltot), lambda i: (0, 0)),
            pl.BlockSpec((1, ltot), lambda i: (0, 0)),
        ],
        out_specs=(pl.BlockSpec((tr, ltot), lambda i: (i, 0)),
                   pl.BlockSpec((1, 3, ltot), lambda i: (i, 0, 0))),
        compiler_params=pltpu.CompilerParams(
            dimension_semantics=("parallel",),
            vmem_limit_bytes=vmem_limit),
    )(xp, w_exp, b_exp)
    return y1, st, tr


# ---------------------------------------------------------------------------
# Kernel 2: row-tiled block-diagonal graph aggregation (bn0 scale folded into
#           A) emitting y2 (bf16) plus per-tile pivot-shifted stats
# ---------------------------------------------------------------------------
def _agg_kernel(x_ref, a_ref, y_ref, st_ref, acc_ref):
    k = pl.program_id(2)

    @pl.when(k == 0)
    def _():
        acc_ref[...] = jnp.zeros_like(acc_ref)

    acc_ref[...] += jnp.dot(x_ref[...], a_ref[0, 0],
                            preferred_element_type=jnp.float32)

    @pl.when(k == pl.num_programs(2) - 1)
    def _():
        y = acc_ref[...]
        y_ref[...] = y.astype(y_ref.dtype)
        piv = y[0:1, :]
        d = y - piv
        st_ref[0] = jnp.concatenate(
            [jnp.sum(d, axis=0, keepdims=True),
             jnp.sum(d * d, axis=0, keepdims=True),
             piv], axis=0)


def graph_aggregate(y1, a_blocks, *, nt, lw, n_cb, num_k, cap_bytes,
                    vmem_limit):
    per_row = 2 * 2 * lw + 2 * 2 * lw + 4 * lw       # x dbl + y2 dbl (bf16) + acc f32
    fixed = 2 * 2 * lw * lw + 32 * lw                # A block (x2, bf16) + stats
    tr = _pick_row_tile(nt, per_row, fixed, cap_bytes)
    n_tiles = nt // tr
    y2, st = pl.pallas_call(
        _agg_kernel,
        out_shape=(jax.ShapeDtypeStruct((nt, n_cb * lw), jnp.bfloat16),
                   jax.ShapeDtypeStruct((n_tiles, 3, n_cb * lw), jnp.float32)),
        grid=(n_tiles, n_cb, num_k),
        in_specs=[
            pl.BlockSpec((tr, lw), lambda r, cb, k: (r, k * n_cb + cb)),
            pl.BlockSpec((1, 1, lw, lw), lambda r, cb, k: (k, cb, 0, 0)),
        ],
        out_specs=(pl.BlockSpec((tr, lw), lambda r, cb, k: (r, cb)),
                   pl.BlockSpec((1, 3, lw), lambda r, cb, k: (r, 0, cb))),
        scratch_shapes=[pltpu.VMEM((tr, lw), jnp.float32)],
        compiler_params=pltpu.CompilerParams(
            dimension_semantics=("parallel", "parallel", "arbitrary"),
            vmem_limit_bytes=vmem_limit),
    )(y1, a_blocks)
    return y2, st, tr


# ---------------------------------------------------------------------------
# Kernel 3: bn(gamma=1e-6) + residual affine + ReLU (lane-dense elementwise)
# ---------------------------------------------------------------------------
def _epilogue_kernel(y_ref, r_ref, aff_ref, o_ref):
    y = y_ref[...].astype(jnp.float32)
    r = r_ref[...].astype(jnp.float32)
    o = (y * aff_ref[0:1, :] + aff_ref[1:2, :]
         + r * aff_ref[2:3, :] + aff_ref[3:4, :])
    o_ref[...] = jnp.maximum(o, 0.0)


def bn_res_relu(y2, res_arr, aff, *, nt, lw, n_cb, res_off, cap_bytes,
                vmem_limit):
    per_row = 2 * 2 * lw + 2 * 2 * lw + 2 * 4 * lw   # y2 + res (bf16) + out f32, dbl
    fixed = 2 * 4 * 4 * lw
    tr = _pick_row_tile(nt, per_row, fixed, cap_bytes)
    n_tiles = nt // tr
    return pl.pallas_call(
        _epilogue_kernel,
        out_shape=jax.ShapeDtypeStruct((nt, n_cb * lw), jnp.float32),
        grid=(n_tiles, n_cb),
        in_specs=[
            pl.BlockSpec((tr, lw), lambda r, cb: (r, cb)),
            pl.BlockSpec((tr, lw), lambda r, cb: (r, res_off + cb)),
            pl.BlockSpec((4, lw), lambda r, cb: (0, cb)),
        ],
        out_specs=pl.BlockSpec((tr, lw), lambda r, cb: (r, cb)),
        compiler_params=pltpu.CompilerParams(
            dimension_semantics=("parallel", "parallel"),
            vmem_limit_bytes=vmem_limit),
    )(y2, res_arr, aff)


# ---------------------------------------------------------------------------
# Forward pass
# ---------------------------------------------------------------------------
def unit_gcn_forward(x0, params, *, groups, num_subset=3):
    eps = 1e-5
    bn_gamma = 1e-6
    n, cin, t, v = x0.shape
    w = params['Linear_weight']                       # (Cin, K*C)
    lb = params['Linear_bias']                        # (1, K*C)
    k_sub = num_subset
    c_out = w.shape[1] // k_sub
    has_down = (cin != c_out)
    nt = n * t
    cap_bytes, vmem_limit = _vmem_budgets()

    c_blk, n_cb = _channel_blocking(c_out, v)
    cp = n_cb * c_blk                                 # padded channel count
    pad = cp - c_out
    lw = c_blk * v                                    # lanes per channel block
    lx = k_sub * n_cb * lw
    ld = n_cb * lw if has_down else 0

    # --- optional zero padding of the channel dim for lane alignment ---
    if pad:
        w = jnp.pad(w.reshape(cin, k_sub, c_out),
                    ((0, 0), (0, 0), (0, pad))).reshape(cin, k_sub * cp)
        lb = jnp.pad(lb.reshape(k_sub, c_out),
                     ((0, 0), (0, pad))).reshape(1, k_sub * cp)

    # --- adjacency normalisation (torch .norm(): divide by column sums) ---
    d_a = params['DecoupleA']                         # (K, groups, V, V)
    learn_a = jnp.tile(d_a, (1, c_out // groups, 1, 1))
    if pad:
        learn_a = jnp.pad(learn_a, ((0, 0), (0, pad), (0, 0), (0, 0)))
    norm_a = learn_a / (jnp.sum(learn_a, axis=2, keepdims=True) + 0.001)

    # --- expand weights block-diagonally over V (lane-packed kernel-1 output) ---
    eye_v = jnp.eye(v, dtype=jnp.float32)
    w4 = w.reshape(cin, k_sub, n_cb, c_blk)
    w_x = jnp.einsum('uv,jkbc->ujkbvc', eye_v, w4).reshape(v * cin, lx)
    b_x = jnp.broadcast_to(lb.reshape(k_sub, n_cb, 1, c_blk),
                           (k_sub, n_cb, v, c_blk)).reshape(1, lx)
    if has_down:
        wd, bd = params['down_w'], params['down_b']
        if pad:
            wd = jnp.pad(wd, ((0, 0), (0, pad)))
            bd = jnp.pad(bd, ((0, 0), (0, pad)))
        w_d = jnp.einsum('uv,jbc->ujbvc', eye_v,
                         wd.reshape(cin, n_cb, c_blk)).reshape(v * cin, ld)
        b_d = jnp.broadcast_to(bd.reshape(n_cb, 1, c_blk),
                               (n_cb, v, c_blk)).reshape(1, ld)
        w_exp = jnp.concatenate([w_x, w_d], axis=1)
        b_exp = jnp.concatenate([b_x, b_d], axis=1)
    else:
        w_exp, b_exp = w_x, b_x

    # --- kernel 1: projection + down conv + per-tile pivot-shifted stats ---
    x_packed = jnp.transpose(x0, (0, 2, 3, 1)).reshape(nt, v * cin)
    y1, st1, tr1 = linear_with_stats(
        x_packed.astype(jnp.bfloat16), w_exp.astype(jnp.bfloat16), b_exp,
        cap_bytes=cap_bytes, vmem_limit=vmem_limit)

    # bn0 (train-mode, gamma=1, beta=0): scale folded into A, shift into the
    # epilogue affine.
    s1x = st1[:, 0, :lx].reshape(-1, k_sub, n_cb, v, c_blk)
    s2x = st1[:, 1, :lx].reshape(-1, k_sub, n_cb, v, c_blk)
    pvx = st1[:, 2, :lx].reshape(-1, k_sub, n_cb, v, c_blk)
    mean0, var0 = _finalize_stats(s1x, s2x, pvx, tr1, axes=(0, 3))
    inv0 = lax.rsqrt(var0 + eps)                      # (K, n_cb, C_blk)
    shift0 = -mean0 * inv0

    scaled_a = inv0.reshape(k_sub, cp)[:, :, None, None] * norm_a
    eye_c = jnp.eye(c_blk, dtype=jnp.float32)
    a_blocks = jnp.einsum('kbcvw,cd->kbvcwd',
                          scaled_a.reshape(k_sub, n_cb, c_blk, v, v),
                          eye_c).reshape(k_sub, n_cb, lw, lw).astype(jnp.bfloat16)
    col_sum = jnp.sum(norm_a, axis=2)                 # (K, Cp, W)
    yb = jnp.einsum('kc,kcw->cw', shift0.reshape(k_sub, cp), col_sum)
    yb_vc = yb.reshape(n_cb, c_blk, v).transpose(0, 2, 1)   # (cb, w, c)

    # --- residual path: source + per-channel bn affine ---
    if has_down:
        s1d = st1[:, 0, lx:].reshape(-1, n_cb, v, c_blk)
        s2d = st1[:, 1, lx:].reshape(-1, n_cb, v, c_blk)
        pvd = st1[:, 2, lx:].reshape(-1, n_cb, v, c_blk)
        mean_d, var_d = _finalize_stats(s1d, s2d, pvd, tr1, axes=(0, 2))
        sc_d = lax.rsqrt(var_d + eps)
        sh_d = -mean_d * sc_d
        res_arr, res_off = y1, k_sub * n_cb
    else:
        sc_d = jnp.ones((n_cb, c_blk), jnp.float32)
        sh_d = jnp.zeros((n_cb, c_blk), jnp.float32)
        res3 = x_packed.reshape(nt, v, cin)
        if pad:
            res3 = jnp.pad(res3, ((0, 0), (0, 0), (0, pad)))
        res_arr = (res3.reshape(nt, v, n_cb, c_blk).transpose(0, 2, 1, 3)
                   .reshape(nt, n_cb * lw).astype(jnp.bfloat16))
        res_off = 0

    # --- kernel 2: row-tiled graph aggregation + stats ---
    y2, st2, tr2 = graph_aggregate(y1, a_blocks, nt=nt, lw=lw, n_cb=n_cb,
                                   num_k=k_sub, cap_bytes=cap_bytes,
                                   vmem_limit=vmem_limit)

    s1y = st2[:, 0, :].reshape(-1, n_cb, v, c_blk)
    s2y = st2[:, 1, :].reshape(-1, n_cb, v, c_blk)
    pvy = st2[:, 2, :].reshape(-1, n_cb, v, c_blk) + yb_vc[None]
    mean_y, var_y = _finalize_stats(s1y, s2y, pvy, tr2, axes=(0, 2))
    sc_y = bn_gamma * lax.rsqrt(var_y + eps)          # (n_cb, C_blk)

    sc_y_lane = jnp.broadcast_to(sc_y[:, None, :], (n_cb, v, c_blk))
    sh_y_lane = (yb_vc - mean_y[:, None, :]) * sc_y[:, None, :]
    sc_r_lane = jnp.broadcast_to(sc_d[:, None, :], (n_cb, v, c_blk))
    sh_r_lane = jnp.broadcast_to(sh_d[:, None, :], (n_cb, v, c_blk))
    aff = jnp.stack([sc_y_lane.reshape(-1), sh_y_lane.reshape(-1),
                     sc_r_lane.reshape(-1), sh_r_lane.reshape(-1)], axis=0)

    # --- kernel 3: bn(1e-6) + residual + ReLU ---
    packed = bn_res_relu(y2, res_arr, aff, nt=nt, lw=lw, n_cb=n_cb,
                         res_off=res_off, cap_bytes=cap_bytes,
                         vmem_limit=vmem_limit)

    # packed (NT, n_cb*V*C_blk) -> NCHW for the module's public API
    out = (packed.reshape(n, t, n_cb, v, c_blk)
           .transpose(0, 2, 4, 1, 3).reshape(n, cp, t, v))
    return out[:, :c_out] if pad else out


# ---------------------------------------------------------------------------
# Pure-JAX reference (mirrors the torch forward semantics)
# ---------------------------------------------------------------------------
def unit_gcn_reference(x0, params, *, groups, num_subset=3):
    hp = jax.lax.Precision.HIGHEST
    eps = 1e-5
    n, cin, t, v = x0.shape
    d_a = params['DecoupleA']
    w = params['Linear_weight']
    lb = params['Linear_bias']
    cout = w.shape[1] // num_subset

    learn_a = jnp.tile(d_a, (1, cout // groups, 1, 1))
    norm_a = learn_a / (jnp.sum(learn_a, axis=2, keepdims=True) + 0.001)

    x = jnp.einsum('nctw,cd->ndtw', x0, w, precision=hp) + lb.reshape(1, -1, 1, 1)
    m = x.mean(axis=(0, 2, 3), keepdims=True)
    s = x.var(axis=(0, 2, 3), keepdims=True)
    x = (x - m) / jnp.sqrt(s + eps)
    x = x.reshape(n, num_subset, cout, t, v)
    x = jnp.einsum('nkctv,kcvw->nctw', x, norm_a, precision=hp)
    m = x.mean(axis=(0, 2, 3), keepdims=True)
    s = x.var(axis=(0, 2, 3), keepdims=True)
    x = (x - m) / jnp.sqrt(s + eps) * 1e-6

    if cin != cout:
        d = (jnp.einsum('nctw,cd->ndtw', x0, params['down_w'], precision=hp)
             + params['down_b'].reshape(1, -1, 1, 1))
        m = d.mean(axis=(0, 2, 3), keepdims=True)
        s = d.var(axis=(0, 2, 3), keepdims=True)
        d = (d - m) / jnp.sqrt(s + eps)
    else:
        d = x0
    return jnp.maximum(x + d, 0.0)


if __name__ == "__main__":
    N, C_in, C_out, T, V = 2, 4, 8, 16, 16
    groups, num_subset = 4, 3

    key = jax.random.PRNGKey(0)
    k_a, k_w, k_d, k_x = jax.random.split(key, 4)

    # Deterministic synthetic parameters (shapes per the module's __init__).
    A = jax.random.uniform(k_a, (num_subset, V, V), dtype=jnp.float32)
    params = {
        'DecoupleA': jnp.tile(A.reshape(num_subset, 1, V, V), (1, groups, 1, 1)),
        'Linear_weight': (jax.random.normal(k_w, (C_in, C_out * num_subset),
                                            dtype=jnp.float32)
                          * math.sqrt(0.5 / (C_out * num_subset))),
        'Linear_bias': jnp.full((1, C_out * num_subset), 1e-6, dtype=jnp.float32),
        # 1x1 down-conv weight, kaiming-normal(fan_out) std, zero bias.
        'down_w': (jax.random.normal(k_d, (C_in, C_out), dtype=jnp.float32)
                   * math.sqrt(2.0 / C_out)),
        'down_b': jnp.zeros((1, C_out), dtype=jnp.float32),
    }

    x0 = jax.random.normal(k_x, (N, C_in, T, V), dtype=jnp.float32)

    fwd = jax.jit(functools.partial(unit_gcn_forward, groups=groups,
                                    num_subset=num_subset))
    out = jax.block_until_ready(fwd(x0, params))

    ref = unit_gcn_reference(x0, params, groups=groups, num_subset=num_subset)
    assert out.shape == (N, C_out, T, V)
    np.testing.assert_allclose(np.asarray(out), np.asarray(ref),
                               rtol=2e-2, atol=2e-2)
    print("KERNEL_OK")
</pallas_src>

<mosaic_0001>
module attributes {stable_mosaic.version = 11 : i64} {
  func.func @_linear_kernel(%arg0: i32, %arg1: memref<16x64xbf16, #tpu.memory_space<vmem>>, %arg2: memref<64x512xbf16, #tpu.memory_space<vmem>>, %arg3: memref<1x512xf32, #tpu.memory_space<vmem>>, %arg4: memref<16x512xbf16, #tpu.memory_space<vmem>>, %arg5: memref<1x3x512xf32, #tpu.memory_space<vmem>>) attributes {dimension_semantics = [#tpu.dimension_semantics<parallel>], iteration_bounds = array<i64: 2>, scalar_prefetch = 0 : i64, scratch_operands = 0 : i64, tpu.core_type = #tpu.core_type<tc>, window_params = [{transform_indices = @transform_0, window_bounds = array<i64: 16, 64>}, {pipeline_mode = #tpu.pipeline_mode<synchronous>, transform_indices = @transform_1, window_bounds = array<i64: 64, 512>}, {pipeline_mode = #tpu.pipeline_mode<synchronous>, transform_indices = @transform_2, window_bounds = array<i64: 1, 512>}, {transform_indices = @transform_3, window_bounds = array<i64: 16, 512>}, {transform_indices = @transform_4, window_bounds = array<i64: 1, 3, 512>}]} {
    %c0 = arith.constant 0 : index
    %c0_0 = arith.constant 0 : index
    %0 = vector.load %arg1[%c0, %c0_0] : memref<16x64xbf16, #tpu.memory_space<vmem>>, vector<16x64xbf16>
    %c0_1 = arith.constant 0 : index
    %c0_2 = arith.constant 0 : index
    %1 = vector.load %arg2[%c0_1, %c0_2] : memref<64x512xbf16, #tpu.memory_space<vmem>>, vector<64x512xbf16>
    %cst = arith.constant dense<0.000000e+00> : vector<16x512xf32>
    %2 = tpu.matmul %0, %1, %cst {dimension_numbers = #tpu.dot_dimension_numbers<[1], [0], [0], [1], [0, 0, 1, 1], [], []>} : vector<16x64xbf16>, vector<64x512xbf16>, vector<16x512xf32> -> vector<16x512xf32>
    %c0_3 = arith.constant 0 : index
    %c0_4 = arith.constant 0 : index
    %3 = vector.load %arg3[%c0_3, %c0_4] : memref<1x512xf32, #tpu.memory_space<vmem>>, vector<1x512xf32>
    %4 = vector.broadcast %3 : vector<1x512xf32> to vector<16x512xf32>
    %5 = arith.addf %2, %4 : vector<16x512xf32>
    %6 = arith.truncf %5 : vector<16x512xf32> to vector<16x512xbf16>
    %c0_5 = arith.constant 0 : index
    %c0_6 = arith.constant 0 : index
    %7 = vector.load %arg4[%c0_5, %c0_6] : memref<16x512xbf16, #tpu.memory_space<vmem>>, vector<16x512xbf16>
    tpu.vector_store %arg4[%c0_5, %c0_6], %6 {strides = array<i32>} : memref<16x512xbf16, #tpu.memory_space<vmem>>, vector<16x512xbf16>,
    %8 = vector.extract_strided_slice %5 {offsets = [0, 0], sizes = [1, 512], strides = [1, 1]} : vector<16x512xf32> to vector<1x512xf32>
    %9 = vector.broadcast %8 : vector<1x512xf32> to vector<16x512xf32>
    %10 = arith.subf %5, %9 : vector<16x512xf32>
    %cst_7 = arith.constant dense<0.000000e+00> : vector<512xf32>
    %11 = vector.multi_reduction <add>, %10, %cst_7 [0] : vector<16x512xf32> to vector<512xf32>
    %12 = vector.shape_cast %11 : vector<512xf32> to vector<1x512xf32>
    %13 = arith.mulf %10, %10 : vector<16x512xf32>
    %cst_8 = arith.constant dense<0.000000e+00> : vector<512xf32>
    %14 = vector.multi_reduction <add>, %13, %cst_8 [0] : vector<16x512xf32> to vector<512xf32>
    %15 = vector.shape_cast %14 : vector<512xf32> to vector<1x512xf32>
    %16 = tpu.concatenate %12, %15, %8 in 0 : vector<1x512xf32>, vector<1x512xf32>, vector<1x512xf32> -> vector<3x512xf32>
    %c0_9 = arith.constant 0 : index
    %c0_10 = arith.constant 0 : index
    %c0_11 = arith.constant 0 : index
    %17 = vector.load %arg5[%c0_9, %c0_10, %c0_11] : memref<1x3x512xf32, #tpu.memory_space<vmem>>, vector<1x3x512xf32>
    %18 = vector.shape_cast %17 : vector<1x3x512xf32> to vector<3x512xf32>
    %19 = vector.shape_cast %16 : vector<3x512xf32> to vector<1x3x512xf32>
    tpu.vector_store %arg5[%c0_9, %c0_10, %c0_11], %19 {strides = array<i32>} : memref<1x3x512xf32, #tpu.memory_space<vmem>>, vector<1x3x512xf32>,
    return
  }
  func.func @transform_0(%arg0: i32) -> (i32, i32) {
    %c0_i32 = arith.constant 0 : i32
    %c0_i32_0 = arith.constant 0 : i32
    return %arg0, %c0_i32 : i32, i32
  }
  func.func @transform_1(%arg0: i32) -> (i32, i32) {
    %c0_i32 = arith.constant 0 : i32
    %c0_i32_0 = arith.constant 0 : i32
    %c0_i32_1 = arith.constant 0 : i32
    return %c0_i32, %c0_i32_0 : i32, i32
  }
  func.func @transform_2(%arg0: i32) -> (i32, i32) {
    %c0_i32 = arith.constant 0 : i32
    %c0_i32_0 = arith.constant 0 : i32
    %c0_i32_1 = arith.constant 0 : i32
    return %c0_i32, %c0_i32_0 : i32, i32
  }
  func.func @transform_3(%arg0: i32) -> (i32, i32) {
    %c0_i32 = arith.constant 0 : i32
    %c0_i32_0 = arith.constant 0 : i32
    return %arg0, %c0_i32 : i32, i32
  }
  func.func @transform_4(%arg0: i32) -> (i32, i32, i32) {
    %c0_i32 = arith.constant 0 : i32
    %c0_i32_0 = arith.constant 0 : i32
    %c0_i32_1 = arith.constant 0 : i32
    return %arg0, %c0_i32, %c0_i32_0 : i32, i32, i32
  }
}

module attributes {stable_mosaic.version = 11 : i64} {
  func.func @_agg_kernel(%arg0: i32, %arg1: i32, %arg2: i32, %arg3: memref<16x128xbf16, #tpu.memory_space<vmem>>, %arg4: memref<1x1x128x128xbf16, #tpu.memory_space<vmem>>, %arg5: memref<16x128xbf16, #tpu.memory_space<vmem>>, %arg6: memref<1x3x128xf32, #tpu.memory_space<vmem>>, %arg7: memref<16x128xf32, #tpu.memory_space<vmem>>) attributes {dimension_semantics = [#tpu.dimension_semantics<parallel>, #tpu.dimension_semantics<parallel>, #tpu.dimension_semantics<arbitrary>], iteration_bounds = array<i64: 2, 1, 3>, scalar_prefetch = 0 : i64, scratch_operands = 1 : i64, tpu.core_type = #tpu.core_type<tc>, window_params = [{transform_indices = @transform_0, window_bounds = array<i64: 16, 128>}, {transform_indices = @transform_1, window_bounds = array<i64: 1, 1, 128, 128>}, {transform_indices = @transform_2, window_bounds = array<i64: 16, 128>}, {transform_indices = @transform_3, window_bounds = array<i64: 1, 3, 128>}]} {
    %c0_i32 = arith.constant 0 : i32
    %0 = arith.cmpi eq, %arg2, %c0_i32 : i32
    %1 = arith.extui %0 : i1 to i32
    %c0_i32_0 = arith.constant 0 : i32
    %2 = arith.cmpi ne, %1, %c0_i32_0 : i32
    scf.if %2 {
      %cst_11 = arith.constant 0.000000e+00 : f32
      %13 = vector.broadcast %cst_11 : f32 to vector<16x128xf32>
      %c0_12 = arith.constant 0 : index
      %c0_13 = arith.constant 0 : index
      %14 = vector.load %arg7[%c0_12, %c0_13] : memref<16x128xf32, #tpu.memory_space<vmem>>, vector<16x128xf32>
      tpu.vector_store %arg7[%c0_12, %c0_13], %13 {strides = array<i32>} : memref<16x128xf32, #tpu.memory_space<vmem>>, vector<16x128xf32>,
    } else {
    }
    %c0 = arith.constant 0 : index
    %c0_1 = arith.constant 0 : index
    %3 = vector.load %arg7[%c0, %c0_1] : memref<16x128xf32, #tpu.memory_space<vmem>>, vector<16x128xf32>
    %c0_2 = arith.constant 0 : index
    %c0_3 = arith.constant 0 : index
    %4 = vector.load %arg3[%c0_2, %c0_3] : memref<16x128xbf16, #tpu.memory_space<vmem>>, vector<16x128xbf16>
    %c0_4 = arith.constant 0 : index
    %c0_5 = arith.constant 0 : index
    %c0_6 = arith.constant 0 : index
    %c0_7 = arith.constant 0 : index
    %5 = vector.load %arg4[%c0_4, %c0_5, %c0_6, %c0_7] : memref<1x1x128x128xbf16, #tpu.memory_space<vmem>>, vector<1x1x128x128xbf16>
    %6 = vector.shape_cast %5 : vector<1x1x128x128xbf16> to vector<128x128xbf16>
    %cst = arith.constant dense<0.000000e+00> : vector<16x128xf32>
    %7 = tpu.matmul %4, %6, %cst {dimension_numbers = #tpu.dot_dimension_numbers<[1], [0], [0], [1], [0, 0, 1, 1], [], []>} : vector<16x128xbf16>, vector<128x128xbf16>, vector<16x128xf32> -> vector<16x128xf32>
    %8 = arith.addf %3, %7 : vector<16x128xf32>
    %c0_8 = arith.constant 0 : index
    %c0_9 = arith.constant 0 : index
    %9 = vector.load %arg7[%c0_8, %c0_9] : memref<16x128xf32, #tpu.memory_space<vmem>>, vector<16x128xf32>
    tpu.vector_store %arg7[%c0_8, %c0_9], %8 {strides = array<i32>} : memref<16x128xf32, #tpu.memory_space<vmem>>, vector<16x128xf32>,
    %c2_i32 = arith.constant 2 : i32
    %10 = arith.cmpi eq, %arg2, %c2_i32 : i32
    %11 = arith.extui %10 : i1 to i32
    %c0_i32_10 = arith.constant 0 : i32
    %12 = arith.cmpi ne, %11, %c0_i32_10 : i32
    scf.if %12 {
      %c0_11 = arith.constant 0 : index
      %c0_12 = arith.constant 0 : index
      %13 = vector.load %arg7[%c0_11, %c0_12] : memref<16x128xf32, #tpu.memory_space<vmem>>, vector<16x128xf32>
      %14 = arith.truncf %13 : vector<16x128xf32> to vector<16x128xbf16>
      %c0_13 = arith.constant 0 : index
      %c0_14 = arith.constant 0 : index
      %15 = vector.load %arg5[%c0_13, %c0_14] : memref<16x128xbf16, #tpu.memory_space<vmem>>, vector<16x128xbf16>
      tpu.vector_store %arg5[%c0_13, %c0_14], %14 {strides = array<i32>} : memref<16x128xbf16, #tpu.memory_space<vmem>>, vector<16x128xbf16>,
      %16 = vector.extract_strided_slice %13 {offsets = [0, 0], sizes = [1, 128], strides = [1, 1]} : vector<16x128xf32> to vector<1x128xf32>
      %17 = vector.broadcast %16 : vector<1x128xf32> to vector<16x128xf32>
      %18 = arith.subf %13, %17 : vector<16x128xf32>
      %cst_15 = arith.constant dense<0.000000e+00> : vector<128xf32>
      %19 = vector.multi_reduction <add>, %18, %cst_15 [0] : vector<16x128xf32> to vector<128xf32>
      %20 = vector.shape_cast %19 : vector<128xf32> to vector<1x128xf32>
      %21 = arith.mulf %18, %18 : vector<16x128xf32>
      %cst_16 = arith.constant dense<0.000000e+00> : vector<128xf32>
      %22 = vector.multi_reduction <add>, %21, %cst_16 [0] : vector<16x128xf32> to vector<128xf32>
      %23 = vector.shape_cast %22 : vector<128xf32> to vector<1x128xf32>
      %24 = tpu.concatenate %20, %23, %16 in 0 : vector<1x128xf32>, vector<1x128xf32>, vector<1x128xf32> -> vector<3x128xf32>
      %c0_17 = arith.constant 0 : index
      %c0_18 = arith.constant 0 : index
      %c0_19 = arith.constant 0 : index
      %25 = vector.load %arg6[%c0_17, %c0_18, %c0_19] : memref<1x3x128xf32, #tpu.memory_space<vmem>>, vector<1x3x128xf32>
      %26 = vector.shape_cast %25 : vector<1x3x128xf32> to vector<3x128xf32>
      %27 = vector.shape_cast %24 : vector<3x128xf32> to vector<1x3x128xf32>
      tpu.vector_store %arg6[%c0_17, %c0_18, %c0_19], %27 {strides = array<i32>} : memref<1x3x128xf32, #tpu.memory_space<vmem>>, vector<1x3x128xf32>,
    } else {
    }
    return
  }
  func.func @transform_0(%arg0: i32, %arg1: i32, %arg2: i32) -> (i32, i32) {
    %c1_i32 = arith.constant 1 : i32
    %0 = arith.muli %arg2, %c1_i32 : i32
    %1 = arith.addi %0, %arg1 : i32
    %c0_i32 = arith.constant 0 : i32
    return %arg0, %1 : i32, i32
  }
  func.func @transform_1(%arg0: i32, %arg1: i32, %arg2: i32) -> (i32, i32, i32, i32) {
    %c0_i32 = arith.constant 0 : i32
    %c0_i32_0 = arith.constant 0 : i32
    %c0_i32_1 = arith.constant 0 : i32
    return %arg2, %arg1, %c0_i32, %c0_i32_0 : i32, i32, i32, i32
  }
  func.func @transform_2(%arg0: i32, %arg1: i32, %arg2: i32) -> (i32, i32) {
    %c0_i32 = arith.constant 0 : i32
    return %arg0, %arg1 : i32, i32
  }
  func.func @transform_3(%arg0: i32, %arg1: i32, %arg2: i32) -> (i32, i32, i32) {
    %c0_i32 = arith.constant 0 : i32
    %c0_i32_0 = arith.constant 0 : i32
    return %arg0, %c0_i32, %arg1 : i32, i32, i32
  }
}

module attributes {stable_mosaic.version = 11 : i64} {
  func.func @_epilogue_kernel(%arg0: i32, %arg1: i32, %arg2: memref<16x128xbf16, #tpu.memory_space<vmem>>, %arg3: memref<16x128xbf16, #tpu.memory_space<vmem>>, %arg4: memref<4x128xf32, #tpu.memory_space<vmem>>, %arg5: memref<16x128xf32, #tpu.memory_space<vmem>>) attributes {dimension_semantics = [#tpu.dimension_semantics<parallel>, #tpu.dimension_semantics<parallel>], iteration_bounds = array<i64: 2, 1>, scalar_prefetch = 0 : i64, scratch_operands = 0 : i64, tpu.core_type = #tpu.core_type<tc>, window_params = [{transform_indices = @transform_0, window_bounds = array<i64: 16, 128>}, {transform_indices = @transform_1, window_bounds = array<i64: 16, 128>}, {transform_indices = @transform_2, window_bounds = array<i64: 4, 128>}, {transform_indices = @transform_3, window_bounds = array<i64: 16, 128>}]} {
    %c0 = arith.constant 0 : index
    %c0_0 = arith.constant 0 : index
    %0 = vector.load %arg2[%c0, %c0_0] : memref<16x128xbf16, #tpu.memory_space<vmem>>, vector<16x128xbf16>
    %1 = arith.extf %0 : vector<16x128xbf16> to vector<16x128xf32>
    %c0_1 = arith.constant 0 : index
    %c0_2 = arith.constant 0 : index
    %2 = vector.load %arg3[%c0_1, %c0_2] : memref<16x128xbf16, #tpu.memory_space<vmem>>, vector<16x128xbf16>
    %3 = arith.extf %2 : vector<16x128xbf16> to vector<16x128xf32>
    %c0_3 = arith.constant 0 : index
    %c0_4 = arith.constant 0 : index
    %4 = vector.load %arg4[%c0_3, %c0_4] : memref<4x128xf32, #tpu.memory_space<vmem>>, vector<1x128xf32>
    %5 = vector.broadcast %4 : vector<1x128xf32> to vector<16x128xf32>
    %6 = arith.mulf %1, %5 : vector<16x128xf32>
    %c1 = arith.constant 1 : index
    %c0_5 = arith.constant 0 : index
    %7 = vector.load %arg4[%c1, %c0_5] : memref<4x128xf32, #tpu.memory_space<vmem>>, vector<1x128xf32>
    %8 = vector.broadcast %7 : vector<1x128xf32> to vector<16x128xf32>
    %9 = arith.addf %6, %8 : vector<16x128xf32>
    %c2 = arith.constant 2 : index
    %c0_6 = arith.constant 0 : index
    %10 = vector.load %arg4[%c2, %c0_6] : memref<4x128xf32, #tpu.memory_space<vmem>>, vector<1x128xf32>
    %11 = vector.broadcast %10 : vector<1x128xf32> to vector<16x128xf32>
    %12 = arith.mulf %3, %11 : vector<16x128xf32>
    %13 = arith.addf %9, %12 : vector<16x128xf32>
    %c3 = arith.constant 3 : index
    %c0_7 = arith.constant 0 : index
    %14 = vector.load %arg4[%c3, %c0_7] : memref<4x128xf32, #tpu.memory_space<vmem>>, vector<1x128xf32>
    %15 = vector.broadcast %14 : vector<1x128xf32> to vector<16x128xf32>
    %16 = arith.addf %13, %15 : vector<16x128xf32>
    %cst = arith.constant 0.000000e+00 : f32
    %17 = vector.broadcast %cst : f32 to vector<16x128xf32>
    %18 = arith.maximumf %16, %17 : vector<16x128xf32>
    %c0_8 = arith.constant 0 : index
    %c0_9 = arith.constant 0 : index
    %19 = vector.load %arg5[%c0_8, %c0_9] : memref<16x128xf32, #tpu.memory_space<vmem>>, vector<16x128xf32>
    tpu.vector_store %arg5[%c0_8, %c0_9], %18 {strides = array<i32>} : memref<16x128xf32, #tpu.memory_space<vmem>>, vector<16x128xf32>,
    return
  }
  func.func @transform_0(%arg0: i32, %arg1: i32) -> (i32, i32) {
    %c0_i32 = arith.constant 0 : i32
    return %arg0, %arg1 : i32, i32
  }
  func.func @transform_1(%arg0: i32, %arg1: i32) -> (i32, i32) {
    %c3_i32 = arith.constant 3 : i32
    %0 = arith.addi %c3_i32, %arg1 : i32
    %c0_i32 = arith.constant 0 : i32
    return %arg0, %0 : i32, i32
  }
  func.func @transform_2(%arg0: i32, %arg1: i32) -> (i32, i32) {
    %c0_i32 = arith.constant 0 : i32
    %c0_i32_0 = arith.constant 0 : i32
    return %c0_i32, %arg1 : i32, i32
  }
  func.func @transform_3(%arg0: i32, %arg1: i32) -> (i32, i32) {
    %c0_i32 = arith.constant 0 : i32
    return %arg0, %arg1 : i32, i32
  }
}

</mosaic_0001>

<llo_original>
// kernel: unit_gcn_forward.3
$region0: #{unit_gcn_forward.3}
  #allocation0 [shape = 'u32[]', space=smem, size = 0x4, offset = 0x4, fixed_abs, tag = 'smem constant byte address 0x4 - core index']
  #allocation1 [shape = 'u32[144,128]{1,0:T(1,128)}', space=vmem, size = 0x12000, scoped, tag = 'internal scratch']
  %s0 = inlined_call_operand.vmem [shape: bf16[32,64], index: 0, kind: input, shape index: {}]
  %s1 = inlined_call_operand.vmem [shape: bf16[64,512], index: 1, kind: input, shape index: {}]
  %s2 = inlined_call_operand.vmem [shape: f32[1,512], index: 2, kind: input, shape index: {}]
  %s3 = inlined_call_operand.vmem [shape: bf16[32,512], index: 3, kind: output, shape index: {0}]
  %s4 = inlined_call_operand.vmem [shape: f32[2,3,512], index: 4, kind: output, shape index: {1}]
  %5 = xla_tuple %s3, %s4
  %s6 = sld [smem:[#allocation0]]
  $region53: #{unit_gcn_forward.3} parent=0
    _
  %s8 = ssub.s32 1, %s6
  %s9 = scalar_select 0, %s8, %s6
  loop: start=0, step=1, limit=4
  $region2: #{unit_gcn_forward.3} parent=0 // loop_pre_header
    _
  $region3: #{unit_gcn_forward.3} parent=0 // loop_header
    %s11 = sphi 0, %s15
    %p12 = scmp.ge.s32.totalorder %s11, 4
    %s21 = sphi 0, %s23
    %s24 = sphi 0, %s21
    %s25 = sphi 0, %s24
    %s41 = sphi 0, %s25
    %s45 = sphi 0, %s45
    %s47 = sphi 0, %s45
    %s48 = sphi 0, %s47
    %s62 = sphi 0, %s48
    %s66 = sphi 0, %s66
    %s68 = sphi 0, %s66
    %s69 = sphi 0, %s68
    %s83 = sphi 0, %s69
    %s89 = sphi 0, %s91
    %s92 = sphi 0, %s89
    %s93 = sphi 0, %s92
    %s109 = sphi 0, %s93
    %s115 = sphi 0, %s117
    %s118 = sphi 0, %s115
    %s119 = sphi 0, %s118
    %s135 = sphi 0, %s119
  $region4: #{unit_gcn_forward.3} parent=0 // loop_header_branch
    %14 = sbr.rel (%p12) target = $region8
  $region5: #{unit_gcn_forward.3} parent=0 // loop_body
    %s16 = ssub.s32 %s11, 1
    %s17 = ssub.s32 %s11, 2
    %s18 = sadd.s32 %s11, 1
    %s19 = ssub.s32 %s11, %s18
    %p20 = scmp.eq.s32.totalorder %s19, 0
    %s22 = sadd.s32 %s21, 1
    %s23 = scalar_select %p20, %s21, %s22
    %p26 = pneg %p20
    %p27 = scmp.eq.s32.totalorder %s11, 1
    %p28 = por %p26, %p27
    %p29 = scmp.ne.s32.totalorder %s21, %s24
    %p30 = scmp.eq.s32.totalorder %s11, 0
    %p31 = por %p29, %p30
    %p32 = scmp.ne.s32.totalorder %s21, %s24
    %p33 = scmp.eq.s32.totalorder %s16, 1
    %p34 = por %p32, %p33
    %p35 = scmp.ne.s32.totalorder %s24, %s25
    %p36 = scmp.eq.s32.totalorder %s16, 0
    %p37 = por %p35, %p36
    %p38 = scmp.ne.s32.totalorder %s24, %s25
    %p39 = scmp.eq.s32.totalorder %s17, 1
    %p40 = por %p38, %p39
    %p42 = scmp.ne.s32.totalorder %s25, %s41
    %p43 = scmp.eq.s32.totalorder %s17, 0
    %p44 = por %p42, %p43
    %s46 = sadd.s32 %s45, 1
    %p49 = scmp.eq.s32.totalorder %s11, 1
    %p50 = scmp.ne.s32.totalorder %s45, %s47
    %p51 = scmp.eq.s32.totalorder %s11, 0
    %p52 = por %p50, %p51
    %p53 = scmp.ne.s32.totalorder %s45, %s47
    %p54 = scmp.eq.s32.totalorder %s16, 1
    %p55 = por %p53, %p54
    %p56 = scmp.ne.s32.totalorder %s47, %s48
    %p57 = scmp.eq.s32.totalorder %s16, 0
    %p58 = por %p56, %p57
    %p59 = scmp.ne.s32.totalorder %s47, %s48
    %p60 = scmp.eq.s32.totalorder %s17, 1
    %p61 = por %p59, %p60
    %p63 = scmp.ne.s32.totalorder %s48, %s62
    %p64 = scmp.eq.s32.totalorder %s17, 0
    %p65 = por %p63, %p64
    %s67 = sadd.s32 %s66, 1
    %p70 = scmp.eq.s32.totalorder %s11, 1
    %p71 = scmp.ne.s32.totalorder %s66, %s68
    %p72 = scmp.eq.s32.totalorder %s11, 0
    %p73 = por %p71, %p72
    %p74 = scmp.ne.s32.totalorder %s66, %s68
    %p75 = scmp.eq.s32.totalorder %s16, 1
    %p76 = por %p74, %p75
    %p77 = scmp.ne.s32.totalorder %s68, %s69
    %p78 = scmp.eq.s32.totalorder %s16, 0
    %p79 = por %p77, %p78
    %p80 = scmp.ne.s32.totalorder %s68, %s69
    %p81 = scmp.eq.s32.totalorder %s17, 1
    %p82 = por %p80, %p81
    %p84 = scmp.ne.s32.totalorder %s69, %s83
    %p85 = scmp.eq.s32.totalorder %s17, 0
    %p86 = por %p84, %p85
    %s87 = ssub.s32 %s11, %s18
    %p88 = scmp.eq.s32.totalorder %s87, 0
    %s90 = sadd.s32 %s89, 1
    %s91 = scalar_select %p88, %s89, %s90
    %p94 = pneg %p88
    %p95 = scmp.eq.s32.totalorder %s11, 1
    %p96 = por %p94, %p95
    %p97 = scmp.ne.s32.totalorder %s89, %s92
    %p98 = scmp.eq.s32.totalorder %s11, 0
    %p99 = por %p97, %p98
    %p100 = scmp.ne.s32.totalorder %s89, %s92
    %p101 = scmp.eq.s32.totalorder %s16, 1
    %p102 = por %p100, %p101
    %p103 = scmp.ne.s32.totalorder %s92, %s93
    %p104 = scmp.eq.s32.totalorder %s16, 0
    %p105 = por %p103, %p104
    %p106 = scmp.ne.s32.totalorder %s92, %s93
    %p107 = scmp.eq.s32.totalorder %s17, 1
    %p108 = por %p106, %p107
    %p110 = scmp.ne.s32.totalorder %s93, %s109
    %p111 = scmp.eq.s32.totalorder %s17, 0
    %p112 = por %p110, %p111
    %s113 = ssub.s32 %s11, %s18
    %p114 = scmp.eq.s32.totalorder %s113, 0
    %s116 = sadd.s32 %s115, 1
    %s117 = scalar_select %p114, %s115, %s116
    %p120 = pneg %p114
    %p121 = scmp.eq.s32.totalorder %s11, 1
    %p122 = por %p120, %p121
    %p123 = scmp.ne.s32.totalorder %s115, %s118
    %p124 = scmp.eq.s32.totalorder %s11, 0
    %p125 = por %p123, %p124
    %p126 = scmp.ne.s32.totalorder %s115, %s118
    %p127 = scmp.eq.s32.totalorder %s16, 1
    %p128 = por %p126, %p127
    %p129 = scmp.ne.s32.totalorder %s118, %s119
    %p130 = scmp.eq.s32.totalorder %s16, 0
    %p131 = por %p129, %p130
    %p132 = scmp.ne.s32.totalorder %s118, %s119
    %p133 = scmp.eq.s32.totalorder %s17, 1
    %p134 = por %p132, %p133
    %p136 = scmp.ne.s32.totalorder %s119, %s135
    %p137 = scmp.eq.s32.totalorder %s17, 0
    %p138 = por %p136, %p137
    %p139 = scmp.le.s32.totalorder 1, %s11
    %p140 = scmp.lt.s32.totalorder %s11, 3
    %p141 = pnand %p139, %p140
    %p142 = pneg %p141
    // Predicated region
    $region9: #{unit_gcn_forward.3} parent=5 // pred_check
      _
    $region10: #{unit_gcn_forward.3} parent=5 // pred_check_branch
      %144 = sbr.rel (%p141) target = $region12
    $region11: #{unit_gcn_forward.3} parent=5 // pred_region
      %s145 = ssub.s32 %s11, 1
      // Predicated region
      $region13: #{unit_gcn_forward.3} parent=11 // pred_check
        %p146 = pneg %p58
      $region14: #{unit_gcn_forward.3} parent=11 // pred_check_branch
        %148 = sbr.rel (%p146) target = $region16
      $region15: #{unit_gcn_forward.3} parent=11 // pred_region
        _
      $region16: #{unit_gcn_forward.3} parent=11 // pred_fallthru
        _
      // Predicated region
      $region17: #{unit_gcn_forward.3} parent=11 // pred_check
        %p149 = pneg %p79
      $region18: #{unit_gcn_forward.3} parent=11 // pred_check_branch
        %151 = sbr.rel (%p149) target = $region20
      $region19: #{unit_gcn_forward.3} parent=11 // pred_region
        _
      $region20: #{unit_gcn_forward.3} parent=11 // pred_fallthru
        _
    $region12: #{unit_gcn_forward.3} parent=5 // pred_fallthru
      _
    %p152 = scmp.lt.s32.totalorder %s11, 2
    // Predicated region
    $region21: #{unit_gcn_forward.3} parent=5 // pred_check
      %p153 = pneg %p152
    $region22: #{unit_gcn_forward.3} parent=5 // pred_check_branch
      %155 = sbr.rel (%p153) target = $region24
    $region23: #{unit_gcn_forward.3} parent=5 // pred_region
      // Predicated region
      $region25: #{unit_gcn_forward.3} parent=23 // pred_check
        %p156 = pneg %p31
      $region26: #{unit_gcn_forward.3} parent=23 // pred_check_branch
        %158 = sbr.rel (%p156) target = $region28
      $region27: #{unit_gcn_forward.3} parent=23 // pred_region
        %s159 = smul.u32 2, %s11
        %p160 = scmp.lt.s32.totalorder %s159, 3
        %s161 = scalar_select %p160, %s159, 3
        %s162 = smul.addr %s161, 4
        %s163 = scalar_lea.vmem %s0, %s162
        %s164 = smul.u32 2, %s11
      $region28: #{unit_gcn_forward.3} parent=23 // pred_fallthru
        _
    $region24: #{unit_gcn_forward.3} parent=5 // pred_fallthru
      _
    %p165 = scmp.le.s32.totalorder 1, %s11
    %p166 = scmp.lt.s32.totalorder %s11, 3
    %p167 = pnand %p165, %p166
    %p168 = pneg %p167
    // Predicated region
    $region29: #{unit_gcn_forward.3} parent=5 // pred_check
      _
    $region30: #{unit_gcn_forward.3} parent=5 // pred_check_branch
      %170 = sbr.rel (%p167) target = $region32
    $region31: #{unit_gcn_forward.3} parent=5 // pred_region
      %s171 = ssub.s32 %s11, 1
      %s172 = smul.u32 2, %s16
      %p173 = scmp.lt.s32.totalorder %s172, 3
      %s174 = scalar_select %p173, %s172, 3
      %s175 = smul.addr %s174, 4
      %s176 = scalar_lea.vmem %s0, %s175
      %p177 = pneg %p37
      %p178 = pneg %p34
      %p179 = pneg %p58
      %p180 = pneg %p55
      %p181 = pneg %p79
      %p182 = pneg %p76
      %p183 = pneg %p105
      %p184 = pneg %p102
      %s185 = smul.u32 2, %s16
      %p186 = scmp.lt.s32.totalorder %s185, 3
      %s187 = scalar_select %p186, %s185, 3
      %s188 = smul.addr %s187, 4
      %s189 = smul.addr %s188, 4
      %s190 = scalar_lea.vmem %s3, %s189
      %p191 = pneg %p131
      %p192 = pneg %p128
      %p193 = scmp.lt.s32.totalorder %s16, 1
      %s194 = scalar_select %p193, %s16, 1
      %s195 = smul.addr %s194, 4
      %s196 = smul.addr %s195, 4
      %s197 = scalar_lea.vmem %s4, %s196
      %s198 = smul.u32 2, %s16
      %p199 = scmp.lt.s32.totalorder %s198, 3
      %s200 = scalar_select %p199, %s198, 3
      %s201 = smul.addr %s200, 4
      %s202 = scalar_lea.vmem %s0, %s201
      %s203 = smul.u32 2, %s16
      %s204 = smul.u32 2, %s16
      %p205 = scmp.lt.s32.totalorder %s204, 3
      %s206 = scalar_select %p205, %s204, 3
      %s207 = smul.addr %s206, 4
      %s208 = smul.addr %s207, 4
      %s209 = scalar_lea.vmem %s3, %s208
      %s210 = smul.u32 2, %s16
      %p211 = scmp.lt.s32.totalorder %s16, 1
      %s212 = scalar_select %p211, %s16, 1
      %s213 = smul.addr %s212, 4
      %s214 = smul.addr %s213, 4
      %s215 = scalar_lea.vmem %s4, %s214
      %v217 = vld [vmem:[%s202] sm:$0xf]
      %v218 = vld [vmem:[%s202 + $0x4] sm:$0xf]
      %v219 = vld [vmem:[%s1] sm:$0xff]
      %v220 = vld [vmem:[%s1 + $0x8] sm:$0xff]
      %v221 = vld [vmem:[%s1 + $0x10] sm:$0xff]
      %v222 = vld [vmem:[%s1 + $0x18] sm:$0xff]
      %v223 = vld [vmem:[%s1 + $0x20] sm:$0xff]
      %v224 = vld [vmem:[%s1 + $0x28] sm:$0xff]
      %v225 = vld [vmem:[%s1 + $0x30] sm:$0xff]
      %v226 = vld [vmem:[%s1 + $0x38] sm:$0xff]
      %v227 = vld [vmem:[%s1 + $0x40] sm:$0xff]
      %v228 = vld [vmem:[%s1 + $0x48] sm:$0xff]
      %v229 = vld [vmem:[%s1 + $0x50] sm:$0xff]
      %v230 = vld [vmem:[%s1 + $0x58] sm:$0xff]
      %v231 = vld [vmem:[%s1 + $0x60] sm:$0xff]
      %v232 = vld [vmem:[%s1 + $0x68] sm:$0xff]
      %v233 = vld [vmem:[%s1 + $0x70] sm:$0xff]
      %v234 = vld [vmem:[%s1 + $0x78] sm:$0xff]
      %v235 = vld [vmem:[%s2] sm:$0xf]
      %v237 = vlaneseq
      %v238 = vshrl.u32 %v237, 7
      %v239 = vsub.s32 0, %v238
      %v240 = vrot.slane %v235, %v239
      %v241 = vlaneseq
      %v242 = vshrl.u32 %v241, 7
      %v243 = vsub.s32 1, %v242
      %v244 = vrot.slane %v235, %v243
      %v245 = vlaneseq
      %v246 = vshrl.u32 %v245, 7
      %v247 = vsub.s32 2, %v246
      %v248 = vrot.slane %v235, %v247
      %v249 = vlaneseq
      %v250 = vshrl.u32 %v249, 7
      %v251 = vsub.s32 3, %v250
      %v252 = vrot.slane %v235, %v251
      %v259 = vunpack.c.l.b16 %v217
      %v260 = vunpack.c.l.b16 %v218
      %v261 = vpack.c.b16 %v260, %v259
      %v278 = vunpack.c.l.b16 %v219
      %v279 = vunpack.c.h.b16 %v219
      %v280 = vunpack.c.l.b16 %v220
      %v281 = vunpack.c.h.b16 %v220
      %v282 = vunpack.c.l.b16 %v221
      %v283 = vunpack.c.h.b16 %v221
      %v284 = vunpack.c.l.b16 %v222
      %v285 = vunpack.c.h.b16 %v222
      %v286 = vunpack.c.l.b16 %v223
      %v287 = vunpack.c.h.b16 %v223
      %v288 = vunpack.c.l.b16 %v224
      %v289 = vunpack.c.h.b16 %v224
      %v290 = vunpack.c.l.b16 %v225
      %v291 = vunpack.c.h.b16 %v225
      %v292 = vunpack.c.l.b16 %v226
      %v293 = vunpack.c.h.b16 %v226
      %v294 = vunpack.c.l.b16 %v227
      %v295 = vunpack.c.h.b16 %v227
      %v296 = vunpack.c.l.b16 %v228
      %v297 = vunpack.c.h.b16 %v228
      %v298 = vunpack.c.l.b16 %v229
      %v299 = vunpack.c.h.b16 %v229
      %v300 = vunpack.c.l.b16 %v230
      %v301 = vunpack.c.h.b16 %v230
      %v302 = vunpack.c.l.b16 %v231
      %v303 = vunpack.c.h.b16 %v231
      %v304 = vunpack.c.l.b16 %v232
      %v305 = vunpack.c.h.b16 %v232
      %v306 = vunpack.c.l.b16 %v233
      %v307 = vunpack.c.h.b16 %v233
      %v308 = vunpack.c.l.b16 %v234
      %v309 = vunpack.c.h.b16 %v234
      %v310 = vpack.c.b16 %v282, %v278
      %v311 = vpack.c.b16 %v283, %v279
      %v312 = vpack.c.b16 %v284, %v280
      %v313 = vpack.c.b16 %v285, %v281
      %v314 = vpack.c.b16 %v290, %v286
      %v315 = vpack.c.b16 %v291, %v287
      %v316 = vpack.c.b16 %v292, %v288
      %v317 = vpack.c.b16 %v293, %v289
      %v318 = vpack.c.b16 %v298, %v294
      %v319 = vpack.c.b16 %v299, %v295
      %v320 = vpack.c.b16 %v300, %v296
      %v321 = vpack.c.b16 %v301, %v297
      %v322 = vpack.c.b16 %v306, %v302
      %v323 = vpack.c.b16 %v307, %v303
      %v324 = vpack.c.b16 %v308, %v304
      %v325 = vpack.c.b16 %v309, %v305
      %vm342 = vcmask 523264
      %v344 = vsel %vm342, %v261, 0
      %346 = vmatprep.subr.bf16.mxu0 %v311
      %347 = vmatpush1.bf16.msra.mxu0 %v310
      %348 = vmatprep.subr.bf16.mxu0 %v315
      %349 = vmatpush1.bf16.msra.mxu0 %v314
      %350 = vmatprep.subr.bf16.mxu0 %v319
      %351 = vmatpush1.bf16.msra.mxu0 %v318
      %352 = vmatprep.subr.bf16.mxu0 %v323
      %353 = vmatpush1.bf16.msra.mxu0 %v322
      %354 = vmatprep.subr.bf16.mxu0 0
      %355 = vmatpush1.bf16.msra.mxu0 0
      %356 = vmatprep.subr.bf16.mxu0 0
      %357 = vmatpush1.bf16.msra.mxu0 0
      %358 = vmatprep.subr.bf16.mxu0 0
      %359 = vmatpush1.bf16.msra.mxu0 0
      %360 = vmatprep.subr.bf16.mxu0 0
      %361 = vmatpush1.bf16.msra.mxu0 0
      %362 = vmatprep.subr.bf16.mxu0 0
      %363 = vmatpush1.bf16.msra.mxu0 0
      %364 = vmatprep.subr.bf16.mxu0 0
      %365 = vmatpush1.bf16.msra.mxu0 0
      %366 = vmatprep.subr.bf16.mxu0 0
      %367 = vmatpush1.bf16.msra.mxu0 0
      %368 = vmatprep.subr.bf16.mxu0 0
      %369 = vmatpush1.bf16.msra.mxu0 0
      %370 = vmatprep.subr.bf16.mxu0 0
      %371 = vmatpush1.bf16.msra.mxu0 0
      %372 = vmatprep.subr.bf16.mxu0 0
      %373 = vmatpush1.bf16.msra.mxu0 0
      %374 = vmatprep.subr.bf16.mxu0 0
      %375 = vmatpush1.bf16.msra.mxu0 0
      %376 = vmatprep.subr.bf16.mxu0 0
      %377 = vmatpush1.bf16.msra.mxu0 0
      %378 = vmatprep.mubr.bf16.mxu0 0
      %379 = vmatmul.mubr.bf16.gmra.mrb[0].mxu0 %v344
      %v380 = vpop.f32.mrb[0].mxu0
      %v381 = vadd.f32 %v240, %v380
      %v382 = vpop.f32.mrb[0].mxu0
      %v383 = vadd.f32 %v244, %v382
      %v384 = vpop.f32.mrb[0].mxu0
      %v385 = vadd.f32 %v240, %v384
      %v386 = vpop.f32.mrb[0].mxu0
      %v387 = vadd.f32 %v244, %v386
      %388 = vdwg.mxu0
      %389 = vmatprep.subr.bf16.mxu0 %v313
      %390 = vmatpush1.bf16.msra.mxu0 %v312
      %391 = vmatprep.subr.bf16.mxu0 %v317
      %392 = vmatpush1.bf16.msra.mxu0 %v316
      %393 = vmatprep.subr.bf16.mxu0 %v321
      %394 = vmatpush1.bf16.msra.mxu0 %v320
      %395 = vmatprep.subr.bf16.mxu0 %v325
      %396 = vmatpush1.bf16.msra.mxu0 %v324
      %397 = vmatprep.subr.bf16.mxu0 0
      %398 = vmatpush1.bf16.msra.mxu0 0
      %399 = vmatprep.subr.bf16.mxu0 0
      %400 = vmatpush1.bf16.msra.mxu0 0
      %401 = vmatprep.subr.bf16.mxu0 0
      %402 = vmatpush1.bf16.msra.mxu0 0
      %403 = vmatprep.subr.bf16.mxu0 0
      %404 = vmatpush1.bf16.msra.mxu0 0
      %405 = vmatprep.subr.bf16.mxu0 0
      %406 = vmatpush1.bf16.msra.mxu0 0
      %407 = vmatprep.subr.bf16.mxu0 0
      %408 = vmatpush1.bf16.msra.mxu0 0
      %409 = vmatprep.subr.bf16.mxu0 0
      %410 = vmatpush1.bf16.msra.mxu0 0
      %411 = vmatprep.subr.bf16.mxu0 0
      %412 = vmatpush1.bf16.msra.mxu0 0
      %413 = vmatprep.subr.bf16.mxu0 0
      %414 = vmatpush1.bf16.msra.mxu0 0
      %415 = vmatprep.subr.bf16.mxu0 0
      %416 = vmatpush1.bf16.msra.mxu0 0
      %417 = vmatprep.subr.bf16.mxu0 0
      %418 = vmatpush1.bf16.msra.mxu0 0
      %419 = vmatprep.subr.bf16.mxu0 0
      %420 = vmatpush1.bf16.msra.mxu0 0
      %421 = vmatprep.mubr.bf16.mxu0 0
      %422 = vmatmul.mubr.bf16.gmra.mrb[0].mxu0 %v344
      %v423 = vpop.f32.mrb[0].mxu0
      %v424 = vadd.f32 %v248, %v423
      %v425 = vpop.f32.mrb[0].mxu0
      %v426 = vadd.f32 %v252, %v425
      %v427 = vpop.f32.mrb[0].mxu0
      %v428 = vadd.f32 %v248, %v427
      %v429 = vpop.f32.mrb[0].mxu0
      %v430 = vadd.f32 %v252, %v429
      %431 = vdwg.mxu0
      %v432 = vpack.c.bf16 %v385, %v381
      %v433 = vpack.c.bf16 %v387, %v383
      %v434 = vpack.c.bf16 %v428, %v424
      %v435 = vpack.c.bf16 %v430, %v426
      %v440 = vunpack.c.l.b16 %v432
      %v441 = vunpack.c.l.b16 %v433
      %v442 = vunpack.c.l.b16 %v434
      %v443 = vunpack.c.l.b16 %v435
      %v444 = vunpack.c.h.b16 %v432
      %v445 = vunpack.c.h.b16 %v433
      %v446 = vunpack.c.h.b16 %v434
      %v447 = vunpack.c.h.b16 %v435
      %v448 = vpack.c.b16 %v441, %v440
      %v449 = vpack.c.b16 %v443, %v442
      %v450 = vpack.c.b16 %v445, %v444
      %v451 = vpack.c.b16 %v447, %v446
      %456 = vst [vmem:[%s209] sm:$0xff] %v448
      %457 = vst [vmem:[%s209 + $0x8] sm:$0xff] %v449
      %458 = vst [vmem:[%s209 + $0x10] sm:$0xff] %v450
      %459 = vst [vmem:[%s209 + $0x18] sm:$0xff] %v451
      %v460 = vlaneseq
      %v461 = vshrl.u32 %v460, 7
      %v462 = vsub.s32 0, %v461
      %v463 = vrot.slane %v381, %v462
      %v464 = vlaneseq
      %v465 = vshrl.u32 %v464, 7
      %v466 = vsub.s32 0, %v465
      %v467 = vrot.slane %v383, %v466
      %v468 = vlaneseq
      %v469 = vshrl.u32 %v468, 7
      %v470 = vsub.s32 0, %v469
      %v471 = vrot.slane %v424, %v470
      %v472 = vlaneseq
      %v473 = vshrl.u32 %v472, 7
      %v474 = vsub.s32 0, %v473
      %v475 = vrot.slane %v426, %v474
      %v476 = vsub.f32 %v381, %v463
      %v477 = vsub.f32 %v383, %v467
      %v478 = vsub.f32 %v424, %v471
      %v479 = vsub.f32 %v426, %v475
      %v480 = vsub.f32 %v385, %v463
      %v481 = vsub.f32 %v387, %v467
      %v482 = vsub.f32 %v428, %v471
      %v483 = vsub.f32 %v430, %v475
      %v484 = vadd.f32 %v476, %v480
      %v485 = vrot.slane %v484, 4
      %v486 = vadd.f32 %v484, %v485
      %v487 = vrot.slane %v486, 2
      %v488 = vadd.f32 %v486, %v487
      %v489 = vrot.slane %v488, 1
      %v490 = vadd.f32 %v488, %v489
      %v491 = vadd.f32 %v477, %v481
      %v492 = vrot.slane %v491, 4
      %v493 = vadd.f32 %v491, %v492
      %v494 = vrot.slane %v493, 2
      %v495 = vadd.f32 %v493, %v494
      %v496 = vrot.slane %v495, 1
      %v497 = vadd.f32 %v495, %v496
      %v498 = vadd.f32 %v478, %v482
      %v499 = vrot.slane %v498, 4
      %v500 = vadd.f32 %v498, %v499
      %v501 = vrot.slane %v500, 2
      %v502 = vadd.f32 %v500, %v501
      %v503 = vrot.slane %v502, 1
      %v504 = vadd.f32 %v502, %v503
      %v505 = vadd.f32 %v479, %v483
      %v506 = vrot.slane %v505, 4
      %v507 = vadd.f32 %v505, %v506
      %v508 = vrot.slane %v507, 2
      %v509 = vadd.f32 %v507, %v508
      %v510 = vrot.slane %v509, 1
      %v511 = vadd.f32 %v509, %v510
      %v512 = vmul.f32 %v476, %v476
      %v513 = vmul.f32 %v477, %v477
      %v514 = vmul.f32 %v478, %v478
      %v515 = vmul.f32 %v479, %v479
      %v516 = vmul.f32 %v480, %v480
      %v517 = vmul.f32 %v481, %v481
      %v518 = vmul.f32 %v482, %v482
      %v519 = vmul.f32 %v483, %v483
      %v520 = vadd.f32 %v512, %v516
      %v521 = vrot.slane %v520, 4
      %v522 = vadd.f32 %v520, %v521
      %v523 = vrot.slane %v522, 2
      %v524 = vadd.f32 %v522, %v523
      %v525 = vrot.slane %v524, 1
      %v526 = vadd.f32 %v524, %v525
      %v527 = vadd.f32 %v513, %v517
      %v528 = vrot.slane %v527, 4
      %v529 = vadd.f32 %v527, %v528
      %v530 = vrot.slane %v529, 2
      %v531 = vadd.f32 %v529, %v530
      %v532 = vrot.slane %v531, 1
      %v533 = vadd.f32 %v531, %v532
      %v534 = vadd.f32 %v514, %v518
      %v535 = vrot.slane %v534, 4
      %v536 = vadd.f32 %v534, %v535
      %v537 = vrot.slane %v536, 2
      %v538 = vadd.f32 %v536, %v537
      %v539 = vrot.slane %v538, 1
      %v540 = vadd.f32 %v538, %v539
      %v541 = vadd.f32 %v515, %v519
      %v542 = vrot.slane %v541, 4
      %v543 = vadd.f32 %v541, %v542
      %v544 = vrot.slane %v543, 2
      %v545 = vadd.f32 %v543, %v544
      %v546 = vrot.slane %v545, 1
      %v547 = vadd.f32 %v545, %v546
      %v552 = vrot.slane %v381, 6
      %v553 = vrot.slane %v383, 6
      %v554 = vrot.slane %v424, 6
      %v555 = vrot.slane %v426, 6
      %vm560 = vcmask 1040384
      %v561 = vsel %vm560, %v490, %v526
      %v562 = vsel %vm560, %v497, %v533
      %v563 = vsel %vm560, %v504, %v540
      %v564 = vsel %vm560, %v511, %v547
      %vm565 = vcmask 1041408
      %v566 = vsel %vm565, %v561, %v552
      %v567 = vsel %vm565, %v562, %v553
      %v568 = vsel %vm565, %v563, %v554
      %v569 = vsel %vm565, %v564, %v555
      %v574 = vcombine.low %v566, %v567
      %v575 = vcombine.low %v568, %v569
      %578 = vst [vmem:[%s215] sm:$0x77] %v574
      %579 = vst [vmem:[%s215 + $0x8] sm:$0x77] %v575
      %s580 = smul.u32 2, %s16
      %p581 = scmp.lt.s32.totalorder %s580, 3
      %s582 = scalar_select %p581, %s580, 3
      %s583 = smul.addr %s582, 4
      %s584 = smul.addr %s583, 4
      %s585 = scalar_lea.vmem %s3, %s584
      %p586 = scmp.lt.s32.totalorder %s16, 1
      %s587 = scalar_select %p586, %s16, 1
      %s588 = smul.addr %s587, 4
      %s589 = smul.addr %s588, 4
      %s590 = scalar_lea.vmem %s4, %s589
      // Predicated region
      $region33: #{unit_gcn_forward.3} parent=31 // pred_check
        %p591 = pneg %p102
      $region34: #{unit_gcn_forward.3} parent=31 // pred_check_branch
        %593 = sbr.rel (%p591) target = $region36
      $region35: #{unit_gcn_forward.3} parent=31 // pred_region
        %s594 = smul.u32 2, %s16
      $region36: #{unit_gcn_forward.3} parent=31 // pred_fallthru
        _
      // Predicated region
      $region37: #{unit_gcn_forward.3} parent=31 // pred_check
        %p595 = pneg %p128
      $region38: #{unit_gcn_forward.3} parent=31 // pred_check_branch
        %597 = sbr.rel (%p595) target = $region40
      $region39: #{unit_gcn_forward.3} parent=31 // pred_region
        _
      $region40: #{unit_gcn_forward.3} parent=31 // pred_fallthru
        _
    $region32: #{unit_gcn_forward.3} parent=5 // pred_fallthru
      _
    %p598 = scmp.le.s32.totalorder 2, %s11
    // Predicated region
    $region41: #{unit_gcn_forward.3} parent=5 // pred_check
      %p599 = pneg %p598
    $region42: #{unit_gcn_forward.3} parent=5 // pred_check_branch
      %601 = sbr.rel (%p599) target = $region44
    $region43: #{unit_gcn_forward.3} parent=5 // pred_region
      %s602 = ssub.s32 %s11, 2
      // Predicated region
      $region45: #{unit_gcn_forward.3} parent=43 // pred_check
        %p603 = pneg %p108
      $region46: #{unit_gcn_forward.3} parent=43 // pred_check_branch
        %605 = sbr.rel (%p603) target = $region48
      $region47: #{unit_gcn_forward.3} parent=43 // pred_region
        %s606 = smul.u32 2, %s17
        %p607 = scmp.lt.s32.totalorder %s606, 3
        %s608 = scalar_select %p607, %s606, 3
        %s609 = smul.addr %s608, 4
        %s610 = smul.addr %s609, 4
        %s611 = scalar_lea.vmem %s3, %s610
      $region48: #{unit_gcn_forward.3} parent=43 // pred_fallthru
        _
      // Predicated region
      $region49: #{unit_gcn_forward.3} parent=43 // pred_check
        %p612 = pneg %p134
      $region50: #{unit_gcn_forward.3} parent=43 // pred_check_branch
        %614 = sbr.rel (%p612) target = $region52
      $region51: #{unit_gcn_forward.3} parent=43 // pred_region
        %p615 = scmp.lt.s32.totalorder %s17, 1
        %s616 = scalar_select %p615, %s17, 1
        %s617 = smul.addr %s616, 4
        %s618 = smul.addr %s617, 4
        %s619 = scalar_lea.vmem %s4, %s618
      $region52: #{unit_gcn_forward.3} parent=43 // pred_fallthru
        _
    $region44: #{unit_gcn_forward.3} parent=5 // pred_fallthru
      _
  $region6: #{unit_gcn_forward.3} parent=0 // loop_footer
    %s15 = sadd.s32 1, %s11
  $region7: #{unit_gcn_forward.3} parent=0 // loop_footer_branch
    %10 = sbr.rel target = $region3
  $region8: #{unit_gcn_forward.3} parent=0 // loop_exit
    _

// kernel: unit_gcn_forward.4
$region0: #{unit_gcn_forward.4}
  #allocation0 [shape = 'u32[]', space=smem, size = 0x4, offset = 0x4, fixed_abs, tag = 'smem constant byte address 0x4 - core index']
  #allocation1 [shape = 'u32[144,128]{1,0:T(1,128)}', space=vmem, size = 0x12000, scoped, tag = 'internal scratch']
  #allocation2 [shape = 'f32[16,128]{1,0:T(8,128)}', space=vmem, size = 0x2000, scoped, tag = 'scratch operand']
  %s0 = inlined_call_operand.vmem [shape: bf16[32,512], index: 0, kind: input, shape index: {}]
  %s1 = inlined_call_operand.vmem [shape: bf16[3,1,128,128], index: 1, kind: input, shape index: {}]
  %s2 = inlined_call_operand.vmem [shape: bf16[32,128], index: 2, kind: output, shape index: {0}]
  %s3 = inlined_call_operand.vmem [shape: f32[2,3,128], index: 3, kind: output, shape index: {1}]
  %4 = xla_tuple %s2, %s3
  %s5 = sld [smem:[#allocation0]]
  $region98: #{unit_gcn_forward.4} parent=0
    _
  %s7 = ssub.s32 1, %s5
  %s8 = scalar_select 0, %s7, %s5
  $region1: #{unit_gcn_forward.4} parent=0
    #allocation3 [shape = 'u8[8192]{0}', space=vmem, size = 0x2000, scoped, tag = 'input window, operand 0']
    loop: start=0, step=1, limit=8
    $region2: #{unit_gcn_forward.4} parent=1 // loop_pre_header
      _
    $region3: #{unit_gcn_forward.4} parent=1 // loop_header
      %s10 = sphi 0, %s14
      %p11 = scmp.ge.s32.totalorder %s10, 8
      %s17 = sphi 0, %s36
      %s18 = sphi 0, %s32
      %s19 = sphi 0, %s28
      %s20 = sphi 0, %s17
      %s21 = sphi 0, %s18
      %s22 = sphi 0, %s19
      %s23 = sphi 0, %s20
      %s24 = sphi 0, %s21
      %s25 = sphi 0, %s22
      %s43 = sphi 0, %s45
      %s46 = sphi 0, %s43
      %s47 = sphi 0, %s46
      %s63 = sphi 0, %s47
      %s71 = sphi 0, %s73
      %s74 = sphi 0, %s71
      %s75 = sphi 0, %s74
      %s91 = sphi 0, %s75
      %s99 = sphi 0, %s101
      %s102 = sphi 0, %s99
      %s103 = sphi 0, %s102
      %s119 = sphi 0, %s103
      %s127 = sphi 0, %s129
      %s130 = sphi 0, %s127
      %s131 = sphi 0, %s130
      %s147 = sphi 0, %s131
    $region4: #{unit_gcn_forward.4} parent=1 // loop_header_branch
      %13 = sbr.rel (%p11) target = $region8
    $region5: #{unit_gcn_forward.4} parent=1 // loop_body
      %s15 = ssub.s32 %s10, 1
      %s16 = ssub.s32 %s10, 2
      %s26 = sadd.s32 1, %s19
      %p27 = scmp.ge.s32.totalorder %s26, 3
      %s28 = scalar_select %p27, 0, %s26
      %s29 = sadd.s32 1, %s18
      %s30 = scalar_select %p27, %s29, %s18
      %p31 = scmp.ge.s32.totalorder %s30, 1
      %s32 = scalar_select %p31, 0, %s30
      %s33 = sadd.s32 1, %s17
      %s34 = scalar_select %p31, %s33, %s17
      %p35 = scmp.ge.s32.totalorder %s34, 2
      %s36 = scalar_select %p35, 0, %s34
      %s37 = sadd.s32 %s19, %s18
      %s38 = sadd.s32 %s28, %s32
      %s39 = ssub.s32 %s17, %s36
      %s40 = ssub.s32 %s37, %s38
      %s41 = sor.u32 %s39, %s40
      %p42 = scmp.eq.s32.totalorder %s41, 0
      %s44 = sadd.s32 %s43, 1
      %s45 = scalar_select %p42, %s43, %s44
      %p48 = pneg %p42
      %p49 = scmp.eq.s32.totalorder %s10, 5
      %p50 = por %p48, %p49
      %p51 = scmp.ne.s32.totalorder %s43, %s46
      %p52 = scmp.eq.s32.totalorder %s10, 0
      %p53 = por %p51, %p52
      %p54 = scmp.ne.s32.totalorder %s43, %s46
      %p55 = scmp.eq.s32.totalorder %s15, 5
      %p56 = por %p54, %p55
      %p57 = scmp.ne.s32.totalorder %s46, %s47
      %p58 = scmp.eq.s32.totalorder %s15, 0
      %p59 = por %p57, %p58
      %p60 = scmp.ne.s32.totalorder %s46, %s47
      %p61 = scmp.eq.s32.totalorder %s16, 5
      %p62 = por %p60, %p61
      %p64 = scmp.ne.s32.totalorder %s47, %s63
      %p65 = scmp.eq.s32.totalorder %s16, 0
      %p66 = por %p64, %p65
      %s67 = ssub.s32 %s19, %s28
      %s68 = ssub.s32 %s18, %s32
      %s69 = sor.u32 %s67, %s68
      %p70 = scmp.eq.s32.totalorder %s69, 0
      %s72 = sadd.s32 %s71, 1
      %s73 = scalar_select %p70, %s71, %s72
      %p76 = pneg %p70
      %p77 = scmp.eq.s32.totalorder %s10, 5
      %p78 = por %p76, %p77
      %p79 = scmp.ne.s32.totalorder %s71, %s74
      %p80 = scmp.eq.s32.totalorder %s10, 0
      %p81 = por %p79, %p80
      %p82 = scmp.ne.s32.totalorder %s71, %s74
      %p83 = scmp.eq.s32.totalorder %s15, 5
      %p84 = por %p82, %p83
      %p85 = scmp.ne.s32.totalorder %s74, %s75
      %p86 = scmp.eq.s32.totalorder %s15, 0
      %p87 = por %p85, %p86
      %p88 = scmp.ne.s32.totalorder %s74, %s75
      %p89 = scmp.eq.s32.totalorder %s16, 5
      %p90 = por %p88, %p89
      %p92 = scmp.ne.s32.totalorder %s75, %s91
      %p93 = scmp.eq.s32.totalorder %s16, 0
      %p94 = por %p92, %p93
      %s95 = ssub.s32 %s17, %s36
      %s96 = ssub.s32 %s18, %s32
      %s97 = sor.u32 %s95, %s96
      %p98 = scmp.eq.s32.totalorder %s97, 0
      %s100 = sadd.s32 %s99, 1
      %s101 = scalar_select %p98, %s99, %s100
      %p104 = pneg %p98
      %p105 = scmp.eq.s32.totalorder %s10, 5
      %p106 = por %p104, %p105
      %p107 = scmp.ne.s32.totalorder %s99, %s102
      %p108 = scmp.eq.s32.totalorder %s10, 0
      %p109 = por %p107, %p108
      %p110 = scmp.ne.s32.totalorder %s99, %s102
      %p111 = scmp.eq.s32.totalorder %s15, 5
      %p112 = por %p110, %p111
      %p113 = scmp.ne.s32.totalorder %s102, %s103
      %p114 = scmp.eq.s32.totalorder %s15, 0
      %p115 = por %p113, %p114
      %p116 = scmp.ne.s32.totalorder %s102, %s103
      %p117 = scmp.eq.s32.totalorder %s16, 5
      %p118 = por %p116, %p117
      %p120 = scmp.ne.s32.totalorder %s103, %s119
      %p121 = scmp.eq.s32.totalorder %s16, 0
      %p122 = por %p120, %p121
      %s123 = ssub.s32 %s17, %s36
      %s124 = ssub.s32 %s18, %s32
      %s125 = sor.u32 %s123, %s124
      %p126 = scmp.eq.s32.totalorder %s125, 0
      %s128 = sadd.s32 %s127, 1
      %s129 = scalar_select %p126, %s127, %s128
      %p132 = pneg %p126
      %p133 = scmp.eq.s32.totalorder %s10, 5
      %p134 = por %p132, %p133
      %p135 = scmp.ne.s32.totalorder %s127, %s130
      %p136 = scmp.eq.s32.totalorder %s10, 0
      %p137 = por %p135, %p136
      %p138 = scmp.ne.s32.totalorder %s127, %s130
      %p139 = scmp.eq.s32.totalorder %s15, 5
      %p140 = por %p138, %p139
      %p141 = scmp.ne.s32.totalorder %s130, %s131
      %p142 = scmp.eq.s32.totalorder %s15, 0
      %p143 = por %p141, %p142
      %p144 = scmp.ne.s32.totalorder %s130, %s131
      %p145 = scmp.eq.s32.totalorder %s16, 5
      %p146 = por %p144, %p145
      %p148 = scmp.ne.s32.totalorder %s131, %s147
      %p149 = scmp.eq.s32.totalorder %s16, 0
      %p150 = por %p148, %p149
      %p151 = scmp.le.s32.totalorder 1, %s10
      %p152 = scmp.lt.s32.totalorder %s10, 7
      %p153 = pnand %p151, %p152
      %p154 = pneg %p153
      // Predicated region
      $region9: #{unit_gcn_forward.4} parent=5 // pred_check
        _
      $region10: #{unit_gcn_forward.4} parent=5 // pred_check_branch
        %156 = sbr.rel (%p153) target = $region12
      $region11: #{unit_gcn_forward.4} parent=5 // pred_region
        %s157 = ssub.s32 %s10, 1
      $region12: #{unit_gcn_forward.4} parent=5 // pred_fallthru
        _
      %p158 = scmp.lt.s32.totalorder %s10, 6
      // Predicated region
      $region13: #{unit_gcn_forward.4} parent=5 // pred_check
        %p159 = pneg %p158
      $region14: #{unit_gcn_forward.4} parent=5 // pred_check_branch
        %161 = sbr.rel (%p159) target = $region16
      $region15: #{unit_gcn_forward.4} parent=5 // pred_region
        // Predicated region
        $region17: #{unit_gcn_forward.4} parent=15 // pred_check
          %p162 = pneg %p53
        $region18: #{unit_gcn_forward.4} parent=15 // pred_check_branch
          %164 = sbr.rel (%p162) target = $region20
        $region19: #{unit_gcn_forward.4} parent=15 // pred_region
          %s165 = sand.u32 %s43, 1
          %s166 = sand.u32 %s43, 1
          %s167 = smul.addr %s166, 8
          %s168 = scalar_lea.vmem [#allocation3], %s167
          %s169 = sadd.s32 %s19, %s18
          %s170 = smul.u32 2, %s17
          %s171 = smul.addr %s170, 4
          %s172 = sadd.s32 %s169, %s171
          %s173 = smul.addr %s172, 4
          %s174 = scalar_lea.vmem %s0, %s173
          // Predicated region
          $region21: #{unit_gcn_forward.4} parent=19 // pred_check
            _
          $region22: #{unit_gcn_forward.4} parent=19 // pred_check_branch
            %176 = sbr.rel (0) target = $region24
          $region23: #{unit_gcn_forward.4} parent=19 // pred_region
            // Predicated region
            $region25: #{unit_gcn_forward.4} parent=23 // pred_check
              _
            $region26: #{unit_gcn_forward.4} parent=23 // pred_check_branch
              %178 = sbr.rel target = $region28
            $region27: #{unit_gcn_forward.4} parent=23 // pred_region
              // Predicated region
              $region40: #{unit_gcn_forward.4} parent=27 // pred_check
                _
              $region41: #{unit_gcn_forward.4} parent=27 // pred_check_branch
                %195 = sbr.rel (0) target = $region43
              $region42: #{unit_gcn_forward.4} parent=27 // pred_region
                loop: start=0, step=1, limit=1
                $region44: #{unit_gcn_forward.4} parent=42 // loop_pre_header
                  _
                $region45: #{unit_gcn_forward.4} parent=42 // loop_header
                  %s197 = sphi 0, %s201
                  %p198 = scmp.ge.s32.totalorder %s197, 1
                  %s202 = sphi %s174, %s174
                  %s203 = sphi %s168, %s168
                $region46: #{unit_gcn_forward.4} parent=42 // loop_header_branch
                  %200 = sbr.rel (%p198) target = $region50
                $region47: #{unit_gcn_forward.4} parent=42 // loop_body
                  _
                $region48: #{unit_gcn_forward.4} parent=42 // loop_footer
                  %s201 = sadd.s32 1, %s197
                $region49: #{unit_gcn_forward.4} parent=42 // loop_footer_branch
                  %196 = sbr.rel target = $region45
                $region50: #{unit_gcn_forward.4} parent=42 // loop_exit
                  _
                loop: start=0, step=1, limit=1
                $region51: #{unit_gcn_forward.4} parent=42 // loop_pre_header
                  _
                $region52: #{unit_gcn_forward.4} parent=42 // loop_header
                  %s206 = sphi 0, %s210
                  %p207 = scmp.ge.s32.totalorder %s206, 1
                  %s211 = sphi %s174, %s174
                  %s212 = sphi %s168, %s168
                $region53: #{unit_gcn_forward.4} parent=42 // loop_header_branch
                  %209 = sbr.rel (%p207) target = $region57
                $region54: #{unit_gcn_forward.4} parent=42 // loop_body
                  %v213 = vld [vmem:[%s211] sm:$0xf]
                  %214 = vst [vmem:[%s212] sm:$0xf] %v213
                  %v215 = vld [vmem:[%s211 + $0x10] sm:$0xf]
                  %216 = vst [vmem:[%s212 + $0x4] sm:$0xf] %v215
                $region55: #{unit_gcn_forward.4} parent=42 // loop_footer
                  %s210 = sadd.s32 1, %s206
                $region56: #{unit_gcn_forward.4} parent=42 // loop_footer_branch
                  %205 = sbr.rel target = $region52
                $region57: #{unit_gcn_forward.4} parent=42 // loop_exit
                  _
              $region43: #{unit_gcn_forward.4} parent=27 // pred_fallthru
                _
            $region28: #{unit_gcn_forward.4} parent=23 // pred_fallthru
              _
            // Predicated region
            $region29: #{unit_gcn_forward.4} parent=23 // pred_check
              _
            $region30: #{unit_gcn_forward.4} parent=23 // pred_check_branch
              %180 = sbr.rel (0) target = $region32
            $region31: #{unit_gcn_forward.4} parent=23 // pred_region
              loop: start=0, step=1, limit=1
              $region33: #{unit_gcn_forward.4} parent=31 // loop_pre_header
                _
              $region34: #{unit_gcn_forward.4} parent=31 // loop_header
                %s183 = sphi 0, %s187
                %p184 = scmp.ge.s32.totalorder %s183, 1
                %s188 = sphi %s174, %s174
                %s189 = sphi %s168, %s168
              $region35: #{unit_gcn_forward.4} parent=31 // loop_header_branch
                %186 = sbr.rel (%p184) target = $region39
              $region36: #{unit_gcn_forward.4} parent=31 // loop_body
                %v190 = vld [vmem:[%s188] sm:$0xf]
                %191 = vst [vmem:[%s189] sm:$0xf] %v190
                %v192 = vld [vmem:[%s188 + $0x10] sm:$0xf]
                %193 = vst [vmem:[%s189 + $0x4] sm:$0xf] %v192
              $region37: #{unit_gcn_forward.4} parent=31 // loop_footer
                %s187 = sadd.s32 1, %s183
              $region38: #{unit_gcn_forward.4} parent=31 // loop_footer_branch
                %182 = sbr.rel target = $region34
              $region39: #{unit_gcn_forward.4} parent=31 // loop_exit
                _
            $region32: #{unit_gcn_forward.4} parent=23 // pred_fallthru
              _
          $region24: #{unit_gcn_forward.4} parent=19 // pred_fallthru
            _
          %217 = vnop
        $region20: #{unit_gcn_forward.4} parent=15 // pred_fallthru
          _
        // Predicated region
        $region58: #{unit_gcn_forward.4} parent=15 // pred_check
          %p218 = pneg %p81
        $region59: #{unit_gcn_forward.4} parent=15 // pred_check_branch
          %220 = sbr.rel (%p218) target = $region61
        $region60: #{unit_gcn_forward.4} parent=15 // pred_region
          %p221 = scmp.lt.s32.totalorder %s19, 2
          %s222 = scalar_select %p221, %s19, 2
          %p223 = scmp.lt.s32.totalorder %s18, 0
          %s224 = scalar_select %p223, %s18, 0
          %s225 = smul.addr %s224, 16
          %s226 = smul.addr %s222, 16
          %s227 = sadd.s32 %s225, %s226
          %s228 = smul.addr %s227, 4
          %s229 = scalar_lea.vmem %s1, %s228
        $region61: #{unit_gcn_forward.4} parent=15 // pred_fallthru
          _
      $region16: #{unit_gcn_forward.4} parent=5 // pred_fallthru
        _
      %p230 = scmp.le.s32.totalorder 1, %s10
      %p231 = scmp.lt.s32.totalorder %s10, 7
      %p232 = pnand %p230, %p231
      %p233 = pneg %p232
      // Predicated region
      $region62: #{unit_gcn_forward.4} parent=5 // pred_check
        _
      $region63: #{unit_gcn_forward.4} parent=5 // pred_check_branch
        %235 = sbr.rel (%p232) target = $region65
      $region64: #{unit_gcn_forward.4} parent=5 // pred_region
        %s236 = ssub.s32 %s10, 1
        %s237 = sand.u32 %s46, 1
        %s238 = sand.u32 %s46, 1
        %s239 = smul.addr %s238, 8
        %s240 = scalar_lea.vmem [#allocation3], %s239
        // Predicated region
        $region66: #{unit_gcn_forward.4} parent=64 // pred_check
          %p241 = pneg %p59
        $region67: #{unit_gcn_forward.4} parent=64 // pred_check_branch
          %243 = sbr.rel (%p241) target = $region69
        $region68: #{unit_gcn_forward.4} parent=64 // pred_region
          _
        $region69: #{unit_gcn_forward.4} parent=64 // pred_fallthru
          _
        %s244 = sand.u32 %s46, 1
        %s245 = sand.u32 %s46, 1
        %s246 = smul.addr %s245, 8
        %s247 = scalar_lea.vmem [#allocation3], %s246
        %p248 = pneg %p59
        %p249 = pneg %p56
        %p250 = scmp.lt.s32.totalorder %s22, 2
        %s251 = scalar_select %p250, %s22, 2
        %p252 = scmp.lt.s32.totalorder %s21, 0
        %s253 = scalar_select %p252, %s21, 0
        %s254 = smul.addr %s253, 16
        %s255 = smul.addr %s251, 16
        %s256 = sadd.s32 %s254, %s255
        %s257 = smul.addr %s256, 4
        %s258 = scalar_lea.vmem %s1, %s257
        %p259 = pneg %p87
        %p260 = pneg %p84
        %p261 = pneg %p115
        %p262 = pneg %p112
        %s263 = smul.u32 2, %s20
        %p264 = scmp.lt.s32.totalorder %s263, 3
        %s265 = scalar_select %p264, %s263, 3
        %p266 = scmp.lt.s32.totalorder %s21, 0
        %s267 = scalar_select %p266, %s21, 0
        %s268 = sadd.s32 %s267, %s265
        %s269 = smul.addr %s268, 4
        %s270 = scalar_lea.vmem %s2, %s269
        %p271 = pneg %p143
        %p272 = pneg %p140
        %p273 = scmp.lt.s32.totalorder %s20, 1
        %s274 = scalar_select %p273, %s20, 1
        %p275 = scmp.lt.s32.totalorder %s21, 0
        %s276 = scalar_select %p275, %s21, 0
        %s277 = sadd.s32 %s276, %s274
        %s278 = smul.addr %s277, 4
        %s279 = scalar_lea.vmem %s3, %s278
        %s280 = sadd.s32 %s22, %s21
        %s281 = smul.u32 2, %s20
        %p282 = scmp.lt.s32.totalorder %s22, 2
        %s283 = scalar_select %p282, %s22, 2
        %p284 = scmp.lt.s32.totalorder %s21, 0
        %s285 = scalar_select %p284, %s21, 0
        %s286 = smul.addr %s285, 16
        %s287 = smul.addr %s283, 16
        %s288 = sadd.s32 %s286, %s287
        %s289 = smul.addr %s288, 4
        %s290 = scalar_lea.vmem %s1, %s289
        %s291 = smul.u32 2, %s20
        %p292 = scmp.lt.s32.totalorder %s291, 3
        %s293 = scalar_select %p292, %s291, 3
        %p294 = scmp.lt.s32.totalorder %s21, 0
        %s295 = scalar_select %p294, %s21, 0
        %s296 = sadd.s32 %s295, %s293
        %s297 = smul.addr %s296, 4
        %s298 = scalar_lea.vmem %s2, %s297
        %s299 = smul.u32 2, %s20
        %p300 = scmp.lt.s32.totalorder %s20, 1
        %s301 = scalar_select %p300, %s20, 1
        %p302 = scmp.lt.s32.totalorder %s21, 0
        %s303 = scalar_select %p302, %s21, 0
        %s304 = sadd.s32 %s303, %s301
        %s305 = smul.addr %s304, 4
        %s306 = scalar_lea.vmem %s3, %s305
        %p308 = scmp.eq.s32.totalorder %s22, 0
        // Predicated region
        $region70: #{unit_gcn_forward.4} parent=64 // pred_check
          %p309 = pneg %p308
        $region71: #{unit_gcn_forward.4} parent=64 // pred_check_branch
          %311 = sbr.rel (%p309) target = $region73
        $region72: #{unit_gcn_forward.4} parent=64 // pred_region
          %312 = vst [vmem:[#allocation2] sm:$0xff] 0.0
          %313 = vst [vmem:[#allocation2 + $0x8] sm:$0xff] 0.0
        $region73: #{unit_gcn_forward.4} parent=64 // pred_fallthru
          _
        %v314 = vld [vmem:[#allocation2] sm:$0xff]
        %v315 = vld [vmem:[#allocation2 + $0x8] sm:$0xff]
        %v316 = vld [vmem:[%s240] sm:$0xf]
        %v317 = vld [vmem:[%s240 + $0x4] sm:$0xf]
        %v318 = vld [vmem:[%s290] sm:$0xf]
        %v319 = vld [vmem:[%s290 + $0x4] sm:$0xf]
        %v320 = vld [vmem:[%s290 + $0x8] sm:$0xf]
        %v321 = vld [vmem:[%s290 + $0xc] sm:$0xf]
        %v322 = vld [vmem:[%s290 + $0x10] sm:$0xf]
        %v323 = vld [vmem:[%s290 + $0x14] sm:$0xf]
        %v324 = vld [vmem:[%s290 + $0x18] sm:$0xf]
        %v325 = vld [vmem:[%s290 + $0x1c] sm:$0xf]
        %v326 = vld [vmem:[%s290 + $0x20] sm:$0xf]
        %v327 = vld [vmem:[%s290 + $0x24] sm:$0xf]
        %v328 = vld [vmem:[%s290 + $0x28] sm:$0xf]
        %v329 = vld [vmem:[%s290 + $0x2c] sm:$0xf]
        %v330 = vld [vmem:[%s290 + $0x30] sm:$0xf]
        %v331 = vld [vmem:[%s290 + $0x34] sm:$0xf]
        %v332 = vld [vmem:[%s290 + $0x38] sm:$0xf]
        %v333 = vld [vmem:[%s290 + $0x3c] sm:$0xf]
        %v336 = vunpack.c.l.b16 %v316
        %v337 = vunpack.c.l.b16 %v317
        %v338 = vpack.c.b16 %v337, %v336
        %v356 = vunpack.c.l.b16 %v318
        %v357 = vunpack.c.l.b16 %v319
        %v358 = vunpack.c.l.b16 %v320
        %v359 = vunpack.c.l.b16 %v321
        %v360 = vunpack.c.l.b16 %v322
        %v361 = vunpack.c.l.b16 %v323
        %v362 = vunpack.c.l.b16 %v324
        %v363 = vunpack.c.l.b16 %v325
        %v364 = vunpack.c.l.b16 %v326
        %v365 = vunpack.c.l.b16 %v327
        %v366 = vunpack.c.l.b16 %v328
        %v367 = vunpack.c.l.b16 %v329
        %v368 = vunpack.c.l.b16 %v330
        %v369 = vunpack.c.l.b16 %v331
        %v370 = vunpack.c.l.b16 %v332
        %v371 = vunpack.c.l.b16 %v333
        %v372 = vpack.c.b16 %v357, %v356
        %v373 = vpack.c.b16 %v359, %v358
        %v374 = vpack.c.b16 %v361, %v360
        %v375 = vpack.c.b16 %v363, %v362
        %v376 = vpack.c.b16 %v365, %v364
        %v377 = vpack.c.b16 %v367, %v366
        %v378 = vpack.c.b16 %v369, %v368
        %v379 = vpack.c.b16 %v371, %v370
        %388 = vmatprep.subr.bf16.mxu0 0
        %389 = vmatpush1.bf16.msra.mxu0 %v372
        %390 = vmatprep.subr.bf16.mxu0 0
        %391 = vmatpush1.bf16.msra.mxu0 %v373
        %392 = vmatprep.subr.bf16.mxu0 0
        %393 = vmatpush1.bf16.msra.mxu0 %v374
        %394 = vmatprep.subr.bf16.mxu0 0
        %395 = vmatpush1.bf16.msra.mxu0 %v375
        %396 = vmatprep.subr.bf16.mxu0 0
        %397 = vmatpush1.bf16.msra.mxu0 %v376
        %398 = vmatprep.subr.bf16.mxu0 0
        %399 = vmatpush1.bf16.msra.mxu0 %v377
        %400 = vmatprep.subr.bf16.mxu0 0
        %401 = vmatpush1.bf16.msra.mxu0 %v378
        %402 = vmatprep.subr.bf16.mxu0 0
        %403 = vmatpush1.bf16.msra.mxu0 %v379
        %404 = vmatprep.subr.bf16.mxu0 0
        %405 = vmatpush1.bf16.msra.mxu0 0
        %406 = vmatprep.subr.bf16.mxu0 0
        %407 = vmatpush1.bf16.msra.mxu0 0
        %408 = vmatprep.subr.bf16.mxu0 0
        %409 = vmatpush1.bf16.msra.mxu0 0
        %410 = vmatprep.subr.bf16.mxu0 0
        %411 = vmatpush1.bf16.msra.mxu0 0
        %412 = vmatprep.subr.bf16.mxu0 0
        %413 = vmatpush1.bf16.msra.mxu0 0
        %414 = vmatprep.subr.bf16.mxu0 0
        %415 = vmatpush1.bf16.msra.mxu0 0
        %416 = vmatprep.subr.bf16.mxu0 0
        %417 = vmatpush1.bf16.msra.mxu0 0
        %418 = vmatprep.subr.bf16.mxu0 0
        %419 = vmatpush1.bf16.msra.mxu0 0
        %420 = vmatprep.mubr.bf16.mxu0 0
        %421 = vmatmul.mubr.bf16.gmra.mrb[0].mxu0 %v338
        %v422 = vpop.f32.mrb[0].mxu0
        %v423 = vadd.f32 0.0, %v422
        %v424 = vpop.f32.mrb[0].mxu0
        %v425 = vpop.f32.mrb[0].mxu0
        %v426 = vadd.f32 0.0, %v425
        %v427 = vpop.f32.mrb[0].mxu0
        %428 = vdwg.mxu0
        %v429 = vadd.f32 %v314, %v423
        %v430 = vadd.f32 %v315, %v426
        %431 = vst [vmem:[#allocation2] sm:$0xff] %v429
        %432 = vst [vmem:[#allocation2 + $0x8] sm:$0xff] %v430
        %p433 = scmp.eq.s32.totalorder %s22, 2
        // Predicated region
        $region74: #{unit_gcn_forward.4} parent=64 // pred_check
          %p434 = pneg %p433
        $region75: #{unit_gcn_forward.4} parent=64 // pred_check_branch
          %436 = sbr.rel (%p434) target = $region77
        $region76: #{unit_gcn_forward.4} parent=64 // pred_region
          %v437 = vld [vmem:[#allocation2] sm:$0xff]
          %v438 = vld [vmem:[#allocation2 + $0x8] sm:$0xff]
          %v439 = vpack.c.bf16 %v438, %v437
          %v441 = vunpack.c.l.b16 %v439
          %v442 = vunpack.c.h.b16 %v439
          %v443 = vpack.c.b16 %v441, %v441
          %v444 = vpack.c.b16 %v442, %v442
          %447 = vst [vmem:[%s298] sm:$0xf] %v443
          %448 = vst [vmem:[%s298 + $0x4] sm:$0xf] %v444
          %v449 = vlaneseq
          %v450 = vshrl.u32 %v449, 7
          %v451 = vsub.s32 0, %v450
          %v452 = vrot.slane %v437, %v451
          %v453 = vsub.f32 %v437, %v452
          %v454 = vsub.f32 %v438, %v452
          %v455 = vadd.f32 %v453, %v454
          %v456 = vrot.slane %v455, 4
          %v457 = vadd.f32 %v455, %v456
          %v458 = vrot.slane %v457, 2
          %v459 = vadd.f32 %v457, %v458
          %v460 = vrot.slane %v459, 1
          %v461 = vadd.f32 %v459, %v460
          %v462 = vmul.f32 %v453, %v453
          %v463 = vmul.f32 %v454, %v454
          %v464 = vadd.f32 %v462, %v463
          %v465 = vrot.slane %v464, 4
          %v466 = vadd.f32 %v464, %v465
          %v467 = vrot.slane %v466, 2
          %v468 = vadd.f32 %v466, %v467
          %v469 = vrot.slane %v468, 1
          %v470 = vadd.f32 %v468, %v469
          %v472 = vrot.slane %v437, 6
          %vm474 = vcmask 1040384
          %v475 = vsel %vm474, %v461, %v470
          %vm476 = vcmask 1041408
          %v477 = vsel %vm476, %v475, %v472
          %478 = vst [vmem:[%s306] sm:$0x7] %v477
        $region77: #{unit_gcn_forward.4} parent=64 // pred_fallthru
          _
        %s479 = smul.u32 2, %s20
        %p480 = scmp.lt.s32.totalorder %s479, 3
        %s481 = scalar_select %p480, %s479, 3
        %p482 = scmp.lt.s32.totalorder %s21, 0
        %s483 = scalar_select %p482, %s21, 0
        %s484 = sadd.s32 %s483, %s481
        %s485 = smul.addr %s484, 4
        %s486 = scalar_lea.vmem %s2, %s485
        %p487 = scmp.lt.s32.totalorder %s20, 1
        %s488 = scalar_select %p487, %s20, 1
        %p489 = scmp.lt.s32.totalorder %s21, 0
        %s490 = scalar_select %p489, %s21, 0
        %s491 = sadd.s32 %s490, %s488
        %s492 = smul.addr %s491, 4
        %s493 = scalar_lea.vmem %s3, %s492
        // Predicated region
        $region78: #{unit_gcn_forward.4} parent=64 // pred_check
          %p494 = pneg %p112
        $region79: #{unit_gcn_forward.4} parent=64 // pred_check_branch
          %496 = sbr.rel (%p494) target = $region81
        $region80: #{unit_gcn_forward.4} parent=64 // pred_region
          %s497 = smul.u32 2, %s20
        $region81: #{unit_gcn_forward.4} parent=64 // pred_fallthru
          _
        // Predicated region
        $region82: #{unit_gcn_forward.4} parent=64 // pred_check
          %p498 = pneg %p140
        $region83: #{unit_gcn_forward.4} parent=64 // pred_check_branch
          %500 = sbr.rel (%p498) target = $region85
        $region84: #{unit_gcn_forward.4} parent=64 // pred_region
          _
        $region85: #{unit_gcn_forward.4} parent=64 // pred_fallthru
          _
      $region65: #{unit_gcn_forward.4} parent=5 // pred_fallthru
        _
      %p501 = scmp.le.s32.totalorder 2, %s10
      // Predicated region
      $region86: #{unit_gcn_forward.4} parent=5 // pred_check
        %p502 = pneg %p501
      $region87: #{unit_gcn_forward.4} parent=5 // pred_check_branch
        %504 = sbr.rel (%p502) target = $region89
      $region88: #{unit_gcn_forward.4} parent=5 // pred_region
        %s505 = ssub.s32 %s10, 2
        // Predicated region
        $region90: #{unit_gcn_forward.4} parent=88 // pred_check
          %p506 = pneg %p118
        $region91: #{unit_gcn_forward.4} parent=88 // pred_check_branch
          %508 = sbr.rel (%p506) target = $region93
        $region92: #{unit_gcn_forward.4} parent=88 // pred_region
          %s509 = smul.u32 2, %s23
          %p510 = scmp.lt.s32.totalorder %s509, 3
          %s511 = scalar_select %p510, %s509, 3
          %p512 = scmp.lt.s32.totalorder %s24, 0
          %s513 = scalar_select %p512, %s24, 0
          %s514 = sadd.s32 %s513, %s511
          %s515 = smul.addr %s514, 4
          %s516 = scalar_lea.vmem %s2, %s515
        $region93: #{unit_gcn_forward.4} parent=88 // pred_fallthru
          _
        // Predicated region
        $region94: #{unit_gcn_forward.4} parent=88 // pred_check
          %p517 = pneg %p146
        $region95: #{unit_gcn_forward.4} parent=88 // pred_check_branch
          %519 = sbr.rel (%p517) target = $region97
        $region96: #{unit_gcn_forward.4} parent=88 // pred_region
          %p520 = scmp.lt.s32.totalorder %s23, 1
          %s521 = scalar_select %p520, %s23, 1
          %p522 = scmp.lt.s32.totalorder %s24, 0
          %s523 = scalar_select %p522, %s24, 0
          %s524 = sadd.s32 %s523, %s521
          %s525 = smul.addr %s524, 4
          %s526 = scalar_lea.vmem %s3, %s525
        $region97: #{unit_gcn_forward.4} parent=88 // pred_fallthru
          _
      $region89: #{unit_gcn_forward.4} parent=5 // pred_fallthru
        _
    $region6: #{unit_gcn_forward.4} parent=1 // loop_footer
      %s14 = sadd.s32 1, %s10
    $region7: #{unit_gcn_forward.4} parent=1 // loop_footer_branch
      %9 = sbr.rel target = $region3
    $region8: #{unit_gcn_forward.4} parent=1 // loop_exit
      _

// kernel: unit_gcn_forward.5
$region0: #{unit_gcn_forward.5}
  #allocation0 [shape = 'u32[]', space=smem, size = 0x4, offset = 0x4, fixed_abs, tag = 'smem constant byte address 0x4 - core index']
  #allocation1 [shape = 'u32[144,128]{1,0:T(1,128)}', space=vmem, size = 0x12000, scoped, tag = 'internal scratch']
  %s0 = inlined_call_operand.vmem [shape: bf16[32,128], index: 0, kind: input, shape index: {}]
  %s1 = inlined_call_operand.vmem [shape: bf16[32,512], index: 1, kind: input, shape index: {}]
  %s2 = inlined_call_operand.vmem [shape: f32[4,128], index: 2, kind: input, shape index: {}]
  %s3 = inlined_call_operand.vmem [shape: f32[32,128], index: 3, kind: output, shape index: {}]
  %s4 = sld [smem:[#allocation0]]
  $region86: #{unit_gcn_forward.5} parent=0
    _
  %s6 = ssub.s32 1, %s4
  %s7 = scalar_select 0, %s6, %s4
  $region1: #{unit_gcn_forward.5} parent=0
    #allocation2 [shape = 'u8[8192]{0}', space=vmem, size = 0x2000, scoped, tag = 'input window, operand 1']
    loop: start=0, step=1, limit=4
    $region2: #{unit_gcn_forward.5} parent=1 // loop_pre_header
      _
    $region3: #{unit_gcn_forward.5} parent=1 // loop_header
      %s9 = sphi 0, %s13
      %p10 = scmp.ge.s32.totalorder %s9, 4
      %s16 = sphi 0, %s28
      %s17 = sphi 0, %s24
      %s18 = sphi 0, %s16
      %s19 = sphi 0, %s17
      %s20 = sphi 0, %s18
      %s21 = sphi 0, %s19
      %s33 = sphi 0, %s35
      %s36 = sphi 0, %s33
      %s37 = sphi 0, %s36
      %s53 = sphi 0, %s37
      %s63 = sphi 0, %s65
      %s66 = sphi 0, %s63
      %s67 = sphi 0, %s66
      %s83 = sphi 0, %s67
      %s89 = sphi 0, %s91
      %s92 = sphi 0, %s89
      %s93 = sphi 0, %s92
      %s109 = sphi 0, %s93
      %s117 = sphi 0, %s119
      %s120 = sphi 0, %s117
      %s121 = sphi 0, %s120
      %s137 = sphi 0, %s121
    $region4: #{unit_gcn_forward.5} parent=1 // loop_header_branch
      %12 = sbr.rel (%p10) target = $region8
    $region5: #{unit_gcn_forward.5} parent=1 // loop_body
      %s14 = ssub.s32 %s9, 1
      %s15 = ssub.s32 %s9, 2
      %s22 = sadd.s32 1, %s17
      %p23 = scmp.ge.s32.totalorder %s22, 1
      %s24 = scalar_select %p23, 0, %s22
      %s25 = sadd.s32 1, %s16
      %s26 = scalar_select %p23, %s25, %s16
      %p27 = scmp.ge.s32.totalorder %s26, 2
      %s28 = scalar_select %p27, 0, %s26
      %s29 = ssub.s32 %s16, %s28
      %s30 = ssub.s32 %s17, %s24
      %s31 = sor.u32 %s29, %s30
      %p32 = scmp.eq.s32.totalorder %s31, 0
      %s34 = sadd.s32 %s33, 1
      %s35 = scalar_select %p32, %s33, %s34
      %p38 = pneg %p32
      %p39 = scmp.eq.s32.totalorder %s9, 1
      %p40 = por %p38, %p39
      %p41 = scmp.ne.s32.totalorder %s33, %s36
      %p42 = scmp.eq.s32.totalorder %s9, 0
      %p43 = por %p41, %p42
      %p44 = scmp.ne.s32.totalorder %s33, %s36
      %p45 = scmp.eq.s32.totalorder %s14, 1
      %p46 = por %p44, %p45
      %p47 = scmp.ne.s32.totalorder %s36, %s37
      %p48 = scmp.eq.s32.totalorder %s14, 0
      %p49 = por %p47, %p48
      %p50 = scmp.ne.s32.totalorder %s36, %s37
      %p51 = scmp.eq.s32.totalorder %s15, 1
      %p52 = por %p50, %p51
      %p54 = scmp.ne.s32.totalorder %s37, %s53
      %p55 = scmp.eq.s32.totalorder %s15, 0
      %p56 = por %p54, %p55
      %s57 = sadd.s32 %s17, 3
      %s58 = sadd.s32 %s24, 3
      %s59 = ssub.s32 %s16, %s28
      %s60 = ssub.s32 %s57, %s58
      %s61 = sor.u32 %s59, %s60
      %p62 = scmp.eq.s32.totalorder %s61, 0
      %s64 = sadd.s32 %s63, 1
      %s65 = scalar_select %p62, %s63, %s64
      %p68 = pneg %p62
      %p69 = scmp.eq.s32.totalorder %s9, 1
      %p70 = por %p68, %p69
      %p71 = scmp.ne.s32.totalorder %s63, %s66
      %p72 = scmp.eq.s32.totalorder %s9, 0
      %p73 = por %p71, %p72
      %p74 = scmp.ne.s32.totalorder %s63, %s66
      %p75 = scmp.eq.s32.totalorder %s14, 1
      %p76 = por %p74, %p75
      %p77 = scmp.ne.s32.totalorder %s66, %s67
      %p78 = scmp.eq.s32.totalorder %s14, 0
      %p79 = por %p77, %p78
      %p80 = scmp.ne.s32.totalorder %s66, %s67
      %p81 = scmp.eq.s32.totalorder %s15, 1
      %p82 = por %p80, %p81
      %p84 = scmp.ne.s32.totalorder %s67, %s83
      %p85 = scmp.eq.s32.totalorder %s15, 0
      %p86 = por %p84, %p85
      %s87 = ssub.s32 %s17, %s24
      %p88 = scmp.eq.s32.totalorder %s87, 0
      %s90 = sadd.s32 %s89, 1
      %s91 = scalar_select %p88, %s89, %s90
      %p94 = pneg %p88
      %p95 = scmp.eq.s32.totalorder %s9, 1
      %p96 = por %p94, %p95
      %p97 = scmp.ne.s32.totalorder %s89, %s92
      %p98 = scmp.eq.s32.totalorder %s9, 0
      %p99 = por %p97, %p98
      %p100 = scmp.ne.s32.totalorder %s89, %s92
      %p101 = scmp.eq.s32.totalorder %s14, 1
      %p102 = por %p100, %p101
      %p103 = scmp.ne.s32.totalorder %s92, %s93
      %p104 = scmp.eq.s32.totalorder %s14, 0
      %p105 = por %p103, %p104
      %p106 = scmp.ne.s32.totalorder %s92, %s93
      %p107 = scmp.eq.s32.totalorder %s15, 1
      %p108 = por %p106, %p107
      %p110 = scmp.ne.s32.totalorder %s93, %s109
      %p111 = scmp.eq.s32.totalorder %s15, 0
      %p112 = por %p110, %p111
      %s113 = ssub.s32 %s16, %s28
      %s114 = ssub.s32 %s17, %s24
      %s115 = sor.u32 %s113, %s114
      %p116 = scmp.eq.s32.totalorder %s115, 0
      %s118 = sadd.s32 %s117, 1
      %s119 = scalar_select %p116, %s117, %s118
      %p122 = pneg %p116
      %p123 = scmp.eq.s32.totalorder %s9, 1
      %p124 = por %p122, %p123
      %p125 = scmp.ne.s32.totalorder %s117, %s120
      %p126 = scmp.eq.s32.totalorder %s9, 0
      %p127 = por %p125, %p126
      %p128 = scmp.ne.s32.totalorder %s117, %s120
      %p129 = scmp.eq.s32.totalorder %s14, 1
      %p130 = por %p128, %p129
      %p131 = scmp.ne.s32.totalorder %s120, %s121
      %p132 = scmp.eq.s32.totalorder %s14, 0
      %p133 = por %p131, %p132
      %p134 = scmp.ne.s32.totalorder %s120, %s121
      %p135 = scmp.eq.s32.totalorder %s15, 1
      %p136 = por %p134, %p135
      %p138 = scmp.ne.s32.totalorder %s121, %s137
      %p139 = scmp.eq.s32.totalorder %s15, 0
      %p140 = por %p138, %p139
      %p141 = scmp.le.s32.totalorder 1, %s9
      %p142 = scmp.lt.s32.totalorder %s9, 3
      %p143 = pnand %p141, %p142
      %p144 = pneg %p143
      // Predicated region
      $region9: #{unit_gcn_forward.5} parent=5 // pred_check
        _
      $region10: #{unit_gcn_forward.5} parent=5 // pred_check_branch
        %146 = sbr.rel (%p143) target = $region12
      $region11: #{unit_gcn_forward.5} parent=5 // pred_region
        %s147 = ssub.s32 %s9, 1
        // Predicated region
        $region13: #{unit_gcn_forward.5} parent=11 // pred_check
          %p148 = pneg %p105
        $region14: #{unit_gcn_forward.5} parent=11 // pred_check_branch
          %150 = sbr.rel (%p148) target = $region16
        $region15: #{unit_gcn_forward.5} parent=11 // pred_region
          %p151 = scmp.lt.s32.totalorder %s19, 0
          %s152 = scalar_select %p151, %s19, 0
          %s153 = smul.addr %s152, 4
          %s154 = scalar_lea.vmem %s2, %s153
        $region16: #{unit_gcn_forward.5} parent=11 // pred_fallthru
          _
      $region12: #{unit_gcn_forward.5} parent=5 // pred_fallthru
        _
      %p155 = scmp.lt.s32.totalorder %s9, 2
      // Predicated region
      $region17: #{unit_gcn_forward.5} parent=5 // pred_check
        %p156 = pneg %p155
      $region18: #{unit_gcn_forward.5} parent=5 // pred_check_branch
        %158 = sbr.rel (%p156) target = $region20
      $region19: #{unit_gcn_forward.5} parent=5 // pred_region
        // Predicated region
        $region21: #{unit_gcn_forward.5} parent=19 // pred_check
          %p159 = pneg %p43
        $region22: #{unit_gcn_forward.5} parent=19 // pred_check_branch
          %161 = sbr.rel (%p159) target = $region24
        $region23: #{unit_gcn_forward.5} parent=19 // pred_region
          %s162 = smul.u32 2, %s16
          %p163 = scmp.lt.s32.totalorder %s162, 3
          %s164 = scalar_select %p163, %s162, 3
          %p165 = scmp.lt.s32.totalorder %s17, 0
          %s166 = scalar_select %p165, %s17, 0
          %s167 = sadd.s32 %s166, %s164
          %s168 = smul.addr %s167, 4
          %s169 = scalar_lea.vmem %s0, %s168
          %s170 = smul.u32 2, %s16
        $region24: #{unit_gcn_forward.5} parent=19 // pred_fallthru
          _
        // Predicated region
        $region25: #{unit_gcn_forward.5} parent=19 // pred_check
          %p171 = pneg %p73
        $region26: #{unit_gcn_forward.5} parent=19 // pred_check_branch
          %173 = sbr.rel (%p171) target = $region28
        $region27: #{unit_gcn_forward.5} parent=19 // pred_region
          %s174 = sand.u32 %s63, 1
          %s175 = sand.u32 %s63, 1
          %s176 = smul.addr %s175, 8
          %s177 = scalar_lea.vmem [#allocation2], %s176
          %s178 = sadd.s32 %s17, 3
          %s179 = smul.u32 2, %s16
          %s180 = smul.addr %s179, 4
          %s181 = sadd.s32 %s178, %s180
          %s182 = smul.addr %s181, 4
          %s183 = scalar_lea.vmem %s1, %s182
          // Predicated region
          $region29: #{unit_gcn_forward.5} parent=27 // pred_check
            _
          $region30: #{unit_gcn_forward.5} parent=27 // pred_check_branch
            %185 = sbr.rel (0) target = $region32
          $region31: #{unit_gcn_forward.5} parent=27 // pred_region
            // Predicated region
            $region33: #{unit_gcn_forward.5} parent=31 // pred_check
              _
            $region34: #{unit_gcn_forward.5} parent=31 // pred_check_branch
              %187 = sbr.rel target = $region36
            $region35: #{unit_gcn_forward.5} parent=31 // pred_region
              // Predicated region
              $region48: #{unit_gcn_forward.5} parent=35 // pred_check
                _
              $region49: #{unit_gcn_forward.5} parent=35 // pred_check_branch
                %204 = sbr.rel (0) target = $region51
              $region50: #{unit_gcn_forward.5} parent=35 // pred_region
                loop: start=0, step=1, limit=1
                $region52: #{unit_gcn_forward.5} parent=50 // loop_pre_header
                  _
                $region53: #{unit_gcn_forward.5} parent=50 // loop_header
                  %s206 = sphi 0, %s210
                  %p207 = scmp.ge.s32.totalorder %s206, 1
                  %s211 = sphi %s183, %s183
                  %s212 = sphi %s177, %s177
                $region54: #{unit_gcn_forward.5} parent=50 // loop_header_branch
                  %209 = sbr.rel (%p207) target = $region58
                $region55: #{unit_gcn_forward.5} parent=50 // loop_body
                  _
                $region56: #{unit_gcn_forward.5} parent=50 // loop_footer
                  %s210 = sadd.s32 1, %s206
                $region57: #{unit_gcn_forward.5} parent=50 // loop_footer_branch
                  %205 = sbr.rel target = $region53
                $region58: #{unit_gcn_forward.5} parent=50 // loop_exit
                  _
                loop: start=0, step=1, limit=1
                $region59: #{unit_gcn_forward.5} parent=50 // loop_pre_header
                  _
                $region60: #{unit_gcn_forward.5} parent=50 // loop_header
                  %s215 = sphi 0, %s219
                  %p216 = scmp.ge.s32.totalorder %s215, 1
                  %s220 = sphi %s183, %s183
                  %s221 = sphi %s177, %s177
                $region61: #{unit_gcn_forward.5} parent=50 // loop_header_branch
                  %218 = sbr.rel (%p216) target = $region65
                $region62: #{unit_gcn_forward.5} parent=50 // loop_body
                  %v222 = vld [vmem:[%s220] sm:$0xf]
                  %223 = vst [vmem:[%s221] sm:$0xf] %v222
                  %v224 = vld [vmem:[%s220 + $0x10] sm:$0xf]
                  %225 = vst [vmem:[%s221 + $0x4] sm:$0xf] %v224
                $region63: #{unit_gcn_forward.5} parent=50 // loop_footer
                  %s219 = sadd.s32 1, %s215
                $region64: #{unit_gcn_forward.5} parent=50 // loop_footer_branch
                  %214 = sbr.rel target = $region60
                $region65: #{unit_gcn_forward.5} parent=50 // loop_exit
                  _
              $region51: #{unit_gcn_forward.5} parent=35 // pred_fallthru
                _
            $region36: #{unit_gcn_forward.5} parent=31 // pred_fallthru
              _
            // Predicated region
            $region37: #{unit_gcn_forward.5} parent=31 // pred_check
              _
            $region38: #{unit_gcn_forward.5} parent=31 // pred_check_branch
              %189 = sbr.rel (0) target = $region40
            $region39: #{unit_gcn_forward.5} parent=31 // pred_region
              loop: start=0, step=1, limit=1
              $region41: #{unit_gcn_forward.5} parent=39 // loop_pre_header
                _
              $region42: #{unit_gcn_forward.5} parent=39 // loop_header
                %s192 = sphi 0, %s196
                %p193 = scmp.ge.s32.totalorder %s192, 1
                %s197 = sphi %s183, %s183
                %s198 = sphi %s177, %s177
              $region43: #{unit_gcn_forward.5} parent=39 // loop_header_branch
                %195 = sbr.rel (%p193) target = $region47
              $region44: #{unit_gcn_forward.5} parent=39 // loop_body
                %v199 = vld [vmem:[%s197] sm:$0xf]
                %200 = vst [vmem:[%s198] sm:$0xf] %v199
                %v201 = vld [vmem:[%s197 + $0x10] sm:$0xf]
                %202 = vst [vmem:[%s198 + $0x4] sm:$0xf] %v201
              $region45: #{unit_gcn_forward.5} parent=39 // loop_footer
                %s196 = sadd.s32 1, %s192
              $region46: #{unit_gcn_forward.5} parent=39 // loop_footer_branch
                %191 = sbr.rel target = $region42
              $region47: #{unit_gcn_forward.5} parent=39 // loop_exit
                _
            $region40: #{unit_gcn_forward.5} parent=31 // pred_fallthru
              _
          $region32: #{unit_gcn_forward.5} parent=27 // pred_fallthru
            _
          %226 = vnop
        $region28: #{unit_gcn_forward.5} parent=19 // pred_fallthru
          _
      $region20: #{unit_gcn_forward.5} parent=5 // pred_fallthru
        _
      %p227 = scmp.le.s32.totalorder 1, %s9
      %p228 = scmp.lt.s32.totalorder %s9, 3
      %p229 = pnand %p227, %p228
      %p230 = pneg %p229
      // Predicated region
      $region66: #{unit_gcn_forward.5} parent=5 // pred_check
        _
      $region67: #{unit_gcn_forward.5} parent=5 // pred_check_branch
        %232 = sbr.rel (%p229) target = $region69
      $region68: #{unit_gcn_forward.5} parent=5 // pred_region
        %s233 = ssub.s32 %s9, 1
        %s234 = sand.u32 %s66, 1
        %s235 = sand.u32 %s66, 1
        %s236 = smul.addr %s235, 8
        %s237 = scalar_lea.vmem [#allocation2], %s236
        // Predicated region
        $region70: #{unit_gcn_forward.5} parent=68 // pred_check
          %p238 = pneg %p79
        $region71: #{unit_gcn_forward.5} parent=68 // pred_check_branch
          %240 = sbr.rel (%p238) target = $region73
        $region72: #{unit_gcn_forward.5} parent=68 // pred_region
          _
        $region73: #{unit_gcn_forward.5} parent=68 // pred_fallthru
          _
        %s241 = smul.u32 2, %s18
        %p242 = scmp.lt.s32.totalorder %s241, 3
        %s243 = scalar_select %p242, %s241, 3
        %p244 = scmp.lt.s32.totalorder %s19, 0
        %s245 = scalar_select %p244, %s19, 0
        %s246 = sadd.s32 %s245, %s243
        %s247 = smul.addr %s246, 4
        %s248 = scalar_lea.vmem %s0, %s247
        %p249 = pneg %p49
        %p250 = pneg %p46
        %s251 = sand.u32 %s66, 1
        %s252 = sand.u32 %s66, 1
        %s253 = smul.addr %s252, 8
        %s254 = scalar_lea.vmem [#allocation2], %s253
        %p255 = pneg %p79
        %p256 = pneg %p76
        %p257 = scmp.lt.s32.totalorder %s19, 0
        %s258 = scalar_select %p257, %s19, 0
        %s259 = smul.addr %s258, 4
        %s260 = scalar_lea.vmem %s2, %s259
        %p261 = pneg %p105
        %p262 = pneg %p102
        %p263 = pneg %p133
        %p264 = pneg %p130
        %s265 = smul.u32 2, %s18
        %p266 = scmp.lt.s32.totalorder %s265, 3
        %s267 = scalar_select %p266, %s265, 3
        %p268 = scmp.lt.s32.totalorder %s19, 0
        %s269 = scalar_select %p268, %s19, 0
        %s270 = sadd.s32 %s269, %s267
        %s271 = smul.addr %s270, 8
        %s272 = scalar_lea.vmem %s3, %s271
        %s273 = smul.u32 2, %s18
        %p274 = scmp.lt.s32.totalorder %s273, 3
        %s275 = scalar_select %p274, %s273, 3
        %p276 = scmp.lt.s32.totalorder %s19, 0
        %s277 = scalar_select %p276, %s19, 0
        %s278 = sadd.s32 %s277, %s275
        %s279 = smul.addr %s278, 4
        %s280 = scalar_lea.vmem %s0, %s279
        %s281 = smul.u32 2, %s18
        %s282 = sadd.s32 %s19, 3
        %s283 = smul.u32 2, %s18
        %p284 = scmp.lt.s32.totalorder %s19, 0
        %s285 = scalar_select %p284, %s19, 0
        %s286 = smul.addr %s285, 4
        %s287 = scalar_lea.vmem %s2, %s286
        %s288 = smul.u32 2, %s18
        %p289 = scmp.lt.s32.totalorder %s288, 3
        %s290 = scalar_select %p289, %s288, 3
        %p291 = scmp.lt.s32.totalorder %s19, 0
        %s292 = scalar_select %p291, %s19, 0
        %s293 = sadd.s32 %s292, %s290
        %s294 = smul.addr %s293, 8
        %s295 = scalar_lea.vmem %s3, %s294
        %s296 = smul.u32 2, %s18
        %v297 = vld [vmem:[%s280] sm:$0xf]
        %v298 = vld [vmem:[%s280 + $0x4] sm:$0xf]
        %v299 = vunpack.c.l.bf16 %v297
        %v300 = vunpack.c.l.bf16 %v298
        %v301 = vld [vmem:[%s237] sm:$0xf]
        %v302 = vld [vmem:[%s237 + $0x4] sm:$0xf]
        %v303 = vunpack.c.l.bf16 %v301
        %v304 = vunpack.c.l.bf16 %v302
        %v305 = vld [vmem:[%s287] sm:$0x1]
        %v306 = vlaneseq
        %v307 = vshrl.u32 %v306, 7
        %v308 = vsub.s32 0, %v307
        %v309 = vrot.slane %v305, %v308
        %v310 = vmul.f32 %v299, %v309
        %v311 = vmul.f32 %v300, %v309
        %v312 = vld [vmem:[%s287 + $0x1] sm:$0x1]
        %v313 = vlaneseq
        %v314 = vshrl.u32 %v313, 7
        %v315 = vsub.s32 0, %v314
        %v316 = vrot.slane %v312, %v315
        %v317 = vadd.f32 %v310, %v316
        %v318 = vadd.f32 %v311, %v316
        %v319 = vld [vmem:[%s287 + $0x2] sm:$0x1]
        %v320 = vlaneseq
        %v321 = vshrl.u32 %v320, 7
        %v322 = vsub.s32 0, %v321
        %v323 = vrot.slane %v319, %v322
        %v324 = vmul.f32 %v303, %v323
        %v325 = vmul.f32 %v304, %v323
        %v326 = vadd.f32 %v317, %v324
        %v327 = vadd.f32 %v318, %v325
        %v328 = vld [vmem:[%s287 + $0x3] sm:$0x1]
        %v329 = vlaneseq
        %v330 = vshrl.u32 %v329, 7
        %v331 = vsub.s32 0, %v330
        %v332 = vrot.slane %v328, %v331
        %v333 = vadd.f32 %v326, %v332
        %v334 = vadd.f32 %v327, %v332
        %v335 = vmax.f32 %v333, 0.0
        %v336 = vmax.f32 %v334, 0.0
        %337 = vst [vmem:[%s295] sm:$0xff] %v335
        %338 = vst [vmem:[%s295 + $0x8] sm:$0xff] %v336
        %s339 = smul.u32 2, %s18
        %p340 = scmp.lt.s32.totalorder %s339, 3
        %s341 = scalar_select %p340, %s339, 3
        %p342 = scmp.lt.s32.totalorder %s19, 0
        %s343 = scalar_select %p342, %s19, 0
        %s344 = sadd.s32 %s343, %s341
        %s345 = smul.addr %s344, 8
        %s346 = scalar_lea.vmem %s3, %s345
        // Predicated region
        $region74: #{unit_gcn_forward.5} parent=68 // pred_check
          %p347 = pneg %p130
        $region75: #{unit_gcn_forward.5} parent=68 // pred_check_branch
          %349 = sbr.rel (%p347) target = $region77
        $region76: #{unit_gcn_forward.5} parent=68 // pred_region
          %s350 = smul.u32 2, %s18
        $region77: #{unit_gcn_forward.5} parent=68 // pred_fallthru
          _
      $region69: #{unit_gcn_forward.5} parent=5 // pred_fallthru
        _
      %p351 = scmp.le.s32.totalorder 2, %s9
      // Predicated region
      $region78: #{unit_gcn_forward.5} parent=5 // pred_check
        %p352 = pneg %p351
      $region79: #{unit_gcn_forward.5} parent=5 // pred_check_branch
        %354 = sbr.rel (%p352) target = $region81
      $region80: #{unit_gcn_forward.5} parent=5 // pred_region
        %s355 = ssub.s32 %s9, 2
        // Predicated region
        $region82: #{unit_gcn_forward.5} parent=80 // pred_check
          %p356 = pneg %p136
        $region83: #{unit_gcn_forward.5} parent=80 // pred_check_branch
          %358 = sbr.rel (%p356) target = $region85
        $region84: #{unit_gcn_forward.5} parent=80 // pred_region
          %s359 = smul.u32 2, %s20
          %p360 = scmp.lt.s32.totalorder %s359, 3
          %s361 = scalar_select %p360, %s359, 3
          %p362 = scmp.lt.s32.totalorder %s21, 0
          %s363 = scalar_select %p362, %s21, 0
          %s364 = sadd.s32 %s363, %s361
          %s365 = smul.addr %s364, 8
          %s366 = scalar_lea.vmem %s3, %s365
        $region85: #{unit_gcn_forward.5} parent=80 // pred_fallthru
          _
      $region81: #{unit_gcn_forward.5} parent=5 // pred_fallthru
        _
    $region6: #{unit_gcn_forward.5} parent=1 // loop_footer
      %s13 = sadd.s32 1, %s9
    $region7: #{unit_gcn_forward.5} parent=1 // loop_footer_branch
      %8 = sbr.rel target = $region3
    $region8: #{unit_gcn_forward.5} parent=1 // loop_exit
      _

</llo_original>
